<compile_context>
chip_gen: v7x
topology: tpu7x:2x2x1
jax: 0.10.0
libtpu: 0.0.40
codegen_flags: <defaults>
</compile_context>

<pallas_src>
import jax
import jax.numpy as jnp
from jax.experimental import pallas as pl
from jax.experimental.pallas import tpu as pltpu


def _make_pam_kernel(C, CE, exp_bf16):
    def pam_kernel(xq_ref, xall_ref, wk_ref, bk_ref, wv_ref, bv_ref, gamma_ref,
                   o_ref, k_cache, v_cache):
        """One (batch, query-tile) grid step.

        xq_ref   : (1, C, TQ)  f32   query-side slice of x (C-major)
        xall_ref : (1, C, N)   bf16  full image (key/value source), resident per image
        wk_ref   : (Crp, C)    bf16  key conv weight, Cr zero-padded to Crp (>=128)
        bk_ref   : (Crp, 1)    f32   key conv bias (zero in padded rows)
        wv_ref   : (C, C)      bf16  value conv weight
        bv_ref   : (C, 1)      f32   value conv bias
        gamma_ref: (1,)        f32   residual scale (SMEM scalar)
        o_ref    : (1, C, TQ)  f32   output slice (C-major)
        k_cache  : (N, Crp)    bf16  scratch: key projection for the whole image
        v_cache  : (CE, N)     bf16  scratch: value projection + all-ones rows
        """
        qi = pl.program_id(1)
        N = k_cache.shape[0]

        # ---- Per-image K/V projection cache: computed once at the first
        # query tile of each image, reused for qi > 0. ------------------------
        @pl.when(qi == 0)
        def _():
            x_all = xall_ref[0]                                        # (C, N) bf16
            k = jnp.dot(wk_ref[...], x_all,
                        preferred_element_type=jnp.float32) + bk_ref[...]  # (Crp, N) f32
            # Cast to bf16 BEFORE the XLU transpose (half the data through it);
            # keys end up with positions on sublanes so the score matmul is A @ B.
            k_cache[...] = k.astype(jnp.bfloat16).T                    # (N, Crp)
            v = jnp.dot(wv_ref[...], x_all,
                        preferred_element_type=jnp.float32) + bv_ref[...]  # (C, N) f32
            v_cache[pl.ds(0, C), :] = v.astype(jnp.bfloat16)
            # Extra all-ones rows: the P @ V matmul then also emits the softmax
            # denominator (row C) -- no separate cross-sublane reduction needed.
            v_cache[pl.ds(C, CE - C), :] = jnp.ones((CE - C, N), jnp.bfloat16)

        # ---- Query projection for this tile (queries on the lane axis). -----
        x_q = xq_ref[0]                                                # (C, TQ) f32
        q = jnp.dot(wk_ref[...], x_q.astype(jnp.bfloat16),
                    preferred_element_type=jnp.float32) + bk_ref[...]  # (Crp, TQ) f32

        # ---- Scores: s[n, t] = k[:, n] . q[:, t]  (keys on sublanes). -------
        s = jnp.dot(k_cache[...], q.astype(jnp.bfloat16),
                    preferred_element_type=jnp.float32)                # (N, TQ) f32

        # ---- Softmax over keys (axis 0); normalization deferred past P@V. ---
        s_max = jnp.max(s, axis=0, keepdims=True)                      # (1, TQ)
        if exp_bf16:
            # v6e/v7x: bf16 VPU/EUP -- halve exp traffic, skip a cast pass.
            p = jnp.exp((s - s_max).astype(jnp.bfloat16))              # (N, TQ) bf16
        else:
            # v5-class chips: keep the softmax math in f32.
            p = jnp.exp(s - s_max).astype(jnp.bfloat16)                # (N, TQ) bf16

        # out_ext rows [0:C] = unnormalized output (V @ P);
        # out_ext row  C     = softmax denominator (ones-row @ P), f32-accumulated.
        out_ext = jnp.dot(v_cache[...], p,
                          preferred_element_type=jnp.float32)          # (CE, TQ) f32
        out = out_ext[:C, :]                                           # (C, TQ)
        l = out_ext[C:C + 1, :]                                        # (1, TQ)

        # Fold gamma into the (1, TQ) reciprocal before broadcasting over C.
        scale = gamma_ref[0] * pl.reciprocal(l, approx=True)           # (1, TQ)
        o_ref[0] = (out * scale + x_q).astype(o_ref.dtype)

    return pam_kernel


def _vmem_capacity_bytes():
    try:
        return int(pltpu.get_tpu_info().vmem_capacity_bytes)
    except Exception:
        return 128 * 1024 * 1024   # v5e / v6e physical VMEM


def _softmax_in_bf16():
    try:
        kind = jax.devices()[0].device_kind.lower()
    except Exception:
        return False
    # v2/v3/v4/v5* have no bf16 VPU/EUP -- keep the softmax math in f32 there.
    return not any(tag in kind for tag in ("v2", "v3", "v4", "v5"))


def _pick_tq(N, cap):
    best = None
    t = 128
    while t <= min(N, cap):
        if N % t == 0:
            best = t
        t += 128
    return best


def pam_forward(x_nchw, wk4, bk, wv4, bv, gamma, *, tq=None, exp_bf16=None):
    """x_nchw: (B, C, H, W); wk4: (Cr, C, 1, 1); wv4: (C, C, 1, 1); gamma: (1,)."""
    B, C, H, W = x_nchw.shape
    N = H * W
    Cr = wk4.shape[0]
    assert C % 8 == 0, "in_planes must be a multiple of 8"
    # TODO(synk): support H*W that is not a multiple of 128 by padding N and
    # masking the padded key positions with -inf before the softmax.
    Crp = max(128, ((Cr + 127) // 128) * 128)   # lane-dense reduced-channel dim
    CE = C + 8                                  # value rows + all-ones denominator rows

    vmem_cap = _vmem_capacity_bytes()
    big_vmem = vmem_cap >= 96 * 1024 * 1024     # v5e/v6e (128 MiB) vs v7x (64 MiB)
    if tq is None:
        tq_cap = (512 if N <= 4096 else 256) if big_vmem else (256 if N <= 4096 else 128)
        tq = _pick_tq(N, tq_cap)
    assert tq is not None and N % tq == 0 and tq % 128 == 0, \
        "query tile must be a 128-multiple dividing H*W"
    nq = N // tq

    if exp_bf16 is None:
        exp_bf16 = _softmax_in_bf16()

    # C-major layout: pure reshape, no HBM transpose on either side.
    x_cn = x_nchw.reshape(B, C, N).astype(jnp.float32)      # query slices + residual (f32)
    x_cn_bf16 = x_cn.astype(jnp.bfloat16)                   # resident K/V source (bf16)

    wk = wk4.reshape(Cr, C).astype(jnp.float32)
    wk_p = jnp.pad(wk, ((0, Crp - Cr), (0, 0))).astype(jnp.bfloat16)       # (Crp, C)
    bk_p = jnp.pad(bk.astype(jnp.float32), (0, Crp - Cr)).reshape(Crp, 1)  # (Crp, 1)
    wv_b = wv4.reshape(C, C).astype(jnp.bfloat16)                          # (C, C)
    bv2 = bv.astype(jnp.float32).reshape(C, 1)                             # (C, 1)
    gamma1 = gamma.reshape(1).astype(jnp.float32)                          # (1,)

    # Advisory cost estimate for XLA's scheduler.
    proj_flops = 2 * B * N * C * (2 * Crp + C)      # q, k, v 1x1 convs
    attn_flops = 2 * B * N * N * (Crp + CE)         # scores + P@V (+denominator rows)
    bytes_acc = (4 * 2 * B * C * N                  # f32 query slices in + f32 out
                 + 2 * B * C * N                    # bf16 full-image K/V source
                 + 2 * (Crp * C + C * C) + 4 * (Crp + C))

    kernel = _make_pam_kernel(C, CE, exp_bf16)

    out_cn = pl.pallas_call(
        kernel,
        out_shape=jax.ShapeDtypeStruct((B, C, N), x_cn.dtype),
        grid_spec=pltpu.PrefetchScalarGridSpec(
            num_scalar_prefetch=0,
            grid=(B, nq),
            in_specs=[
                # query-side slice of x (f32, also used for the residual add)
                pl.BlockSpec((1, C, tq), lambda b, q: (b, 0, q)),
                # full image (bf16 key/value source); index ignores q -> stays
                # resident per image; single-buffered since it only changes at
                # batch boundaries (saves a full copy of the largest buffer).
                pl.BlockSpec((1, C, N), lambda b, q: (b, 0, 0),
                             pipeline_mode=pl.Buffered(1)),
                pl.BlockSpec((Crp, C), lambda b, q: (0, 0)),   # key conv weight (padded)
                pl.BlockSpec((Crp, 1), lambda b, q: (0, 0)),   # key conv bias (padded)
                pl.BlockSpec((C, C), lambda b, q: (0, 0)),     # value conv weight
                pl.BlockSpec((C, 1), lambda b, q: (0, 0)),     # value conv bias
                pl.BlockSpec(memory_space=pltpu.MemorySpace.SMEM),   # gamma (scalar)
            ],
            out_specs=pl.BlockSpec((1, C, tq), lambda b, q: (b, 0, q)),
            scratch_shapes=[
                pltpu.VMEM((N, Crp), jnp.bfloat16),   # per-image key projection cache
                pltpu.VMEM((CE, N), jnp.bfloat16),    # per-image value cache + ones rows
            ],
        ),
        compiler_params=pltpu.CompilerParams(
            # batch axis parallel (megacore); q-tile axis sequential because the
            # per-image K/V caches are filled at qi == 0 and reused for qi > 0.
            # TODO(synk): for B < num_cores (esp. v7x), hoist the K/V projection
            # out of the kernel and mark the q-tile axis "parallel" instead.
            dimension_semantics=("parallel", "arbitrary"),
            vmem_limit_bytes=(96 if big_vmem else 40) * 1024 * 1024,
        ),
        cost_estimate=pl.CostEstimate(
            flops=int(proj_flops + attn_flops),
            transcendentals=int(B * N * N),
            bytes_accessed=int(bytes_acc),
        ),
    )(x_cn, x_cn_bf16, wk_p, bk_p, wv_b, bv2, gamma1)

    return out_cn.reshape(B, C, H, W)


def pam_reference(x, wk4, bk, wv4, bv, gamma):
    """Pure-JAX reference matching the PyTorch forward exactly (NCHW, f32).

    Note: the PyTorch module uses key_conv for BOTH query and key projections.
    """
    B, C, H, W = x.shape
    N = H * W
    Cr = wk4.shape[0]
    xf = x.reshape(B, C, N)
    q = jnp.einsum("oc,bcn->bon", wk4.reshape(Cr, C), xf) + bk[None, :, None]
    v = jnp.einsum("oc,bcn->bon", wv4.reshape(C, C), xf) + bv[None, :, None]
    s = jnp.einsum("bcn,bcm->bnm", q, q)          # query^T @ key (key_conv used twice)
    attn = jax.nn.softmax(s, axis=-1)
    out = jnp.einsum("bcm,bnm->bcn", v, attn)     # value @ attention^T
    out = gamma[0] * out + xf
    return out.reshape(B, C, H, W)


if __name__ == "__main__":
    B, C, H, W = 2, 32, 16, 16
    ratio = 8
    Cr = C // ratio                      # 4 (padded to 128 inside the wrapper)

    key = jax.random.PRNGKey(0)
    k1, k2, k3, k4, k5 = jax.random.split(key, 5)
    x = jax.random.normal(k1, (B, C, H, W), dtype=jnp.float32)
    wk4 = 0.1 * jax.random.normal(k2, (Cr, C, 1, 1), dtype=jnp.float32)
    bk = 0.1 * jax.random.normal(k3, (Cr,), dtype=jnp.float32)
    wv4 = 0.1 * jax.random.normal(k4, (C, C, 1, 1), dtype=jnp.float32)
    bv = 0.1 * jax.random.normal(k5, (C,), dtype=jnp.float32)
    # Module __init__ sets gamma = 0 (output would equal x); use a nonzero
    # deterministic value so the attention path actually affects the output.
    gamma = jnp.array([0.5], dtype=jnp.float32)

    # N = 256, tq = 128 -> 2 query tiles per image (exercises the K/V cache reuse).
    out = pam_forward(x, wk4, bk, wv4, bv, gamma, tq=128)
    out = jax.block_until_ready(out)

    ref = pam_reference(x, wk4, bk, wv4, bv, gamma)
    assert out.shape == (B, C, H, W)
    max_err = float(jnp.max(jnp.abs(out - ref)))
    # bf16 MXU inputs (+ bf16 exp on v6e/v7x) + approx reciprocal -> compare
    # against the f32 reference with a correspondingly loose tolerance.
    assert jnp.allclose(out, ref, atol=3e-2, rtol=3e-2), f"mismatch vs reference (max abs err {max_err})"

    print("KERNEL_OK")
</pallas_src>

<mosaic_0001>
module attributes {stable_mosaic.version = 11 : i64} {
  func.func @pam_kernel(%arg0: i32, %arg1: i32, %arg2: memref<1x32x128xf32, #tpu.memory_space<vmem>>, %arg3: memref<1x32x256xbf16, #tpu.memory_space<vmem>>, %arg4: memref<128x32xbf16, #tpu.memory_space<vmem>>, %arg5: memref<128x1xf32, #tpu.memory_space<vmem>>, %arg6: memref<32x32xbf16, #tpu.memory_space<vmem>>, %arg7: memref<32x1xf32, #tpu.memory_space<vmem>>, %arg8: memref<1xf32, #tpu.memory_space<smem>>, %arg9: memref<1x32x128xf32, #tpu.memory_space<vmem>>, %arg10: memref<256x128xbf16, #tpu.memory_space<vmem>>, %arg11: memref<40x256xbf16, #tpu.memory_space<vmem>>) attributes {dimension_semantics = [#tpu.dimension_semantics<parallel>, #tpu.dimension_semantics<arbitrary>], iteration_bounds = array<i64: 2, 2>, scalar_prefetch = 0 : i64, scratch_operands = 2 : i64, tpu.core_type = #tpu.core_type<tc>, window_params = [{transform_indices = @transform_0, window_bounds = array<i64: 1, 32, 128>}, {pipeline_mode = #tpu.pipeline_mode<synchronous>, transform_indices = @transform_1, window_bounds = array<i64: 1, 32, 256>}, {pipeline_mode = #tpu.pipeline_mode<synchronous>, transform_indices = @transform_2, window_bounds = array<i64: 128, 32>}, {pipeline_mode = #tpu.pipeline_mode<synchronous>, transform_indices = @transform_3, window_bounds = array<i64: 128, 1>}, {pipeline_mode = #tpu.pipeline_mode<synchronous>, transform_indices = @transform_4, window_bounds = array<i64: 32, 32>}, {pipeline_mode = #tpu.pipeline_mode<synchronous>, transform_indices = @transform_5, window_bounds = array<i64: 32, 1>}, {transform_indices = @transform_6, window_bounds = array<i64: 1>}, {transform_indices = @transform_7, window_bounds = array<i64: 1, 32, 128>}]} {
    %c0_i32 = arith.constant 0 : i32
    %0 = arith.cmpi eq, %arg1, %c0_i32 : i32
    %1 = arith.extui %0 : i1 to i32
    %c0_i32_0 = arith.constant 0 : i32
    %2 = arith.cmpi ne, %1, %c0_i32_0 : i32
    scf.if %2 {
      %c0_18 = arith.constant 0 : index
      %c0_19 = arith.constant 0 : index
      %c0_20 = arith.constant 0 : index
      %34 = vector.load %arg3[%c0_18, %c0_19, %c0_20] : memref<1x32x256xbf16, #tpu.memory_space<vmem>>, vector<1x32x256xbf16>
      %35 = vector.shape_cast %34 : vector<1x32x256xbf16> to vector<32x256xbf16>
      %c0_21 = arith.constant 0 : index
      %c0_22 = arith.constant 0 : index
      %36 = vector.load %arg4[%c0_21, %c0_22] : memref<128x32xbf16, #tpu.memory_space<vmem>>, vector<128x32xbf16>
      %cst_23 = arith.constant dense<0.000000e+00> : vector<128x256xf32>
      %37 = tpu.matmul %36, %35, %cst_23 {dimension_numbers = #tpu.dot_dimension_numbers<[1], [0], [0], [1], [0, 0, 1, 1], [], []>} : vector<128x32xbf16>, vector<32x256xbf16>, vector<128x256xf32> -> vector<128x256xf32>
      %c0_24 = arith.constant 0 : index
      %c0_25 = arith.constant 0 : index
      %38 = vector.load %arg5[%c0_24, %c0_25] : memref<128x1xf32, #tpu.memory_space<vmem>>, vector<128x1xf32>
      %39 = vector.broadcast %38 : vector<128x1xf32> to vector<128x256xf32>
      %40 = arith.addf %37, %39 : vector<128x256xf32>
      %41 = arith.truncf %40 : vector<128x256xf32> to vector<128x256xbf16>
      %42 = tpu.transpose %41, [1, 0] : vector<128x256xbf16> -> vector<256x128xbf16>
      %c0_26 = arith.constant 0 : index
      %c0_27 = arith.constant 0 : index
      %43 = vector.load %arg10[%c0_26, %c0_27] : memref<256x128xbf16, #tpu.memory_space<vmem>>, vector<256x128xbf16>
      tpu.vector_store %arg10[%c0_26, %c0_27], %42 {strides = array<i32>} : memref<256x128xbf16, #tpu.memory_space<vmem>>, vector<256x128xbf16>,
      %c0_28 = arith.constant 0 : index
      %c0_29 = arith.constant 0 : index
      %44 = vector.load %arg6[%c0_28, %c0_29] : memref<32x32xbf16, #tpu.memory_space<vmem>>, vector<32x32xbf16>
      %cst_30 = arith.constant dense<0.000000e+00> : vector<32x256xf32>
      %45 = tpu.matmul %44, %35, %cst_30 {dimension_numbers = #tpu.dot_dimension_numbers<[1], [0], [0], [1], [0, 0, 1, 1], [], []>} : vector<32x32xbf16>, vector<32x256xbf16>, vector<32x256xf32> -> vector<32x256xf32>
      %c0_31 = arith.constant 0 : index
      %c0_32 = arith.constant 0 : index
      %46 = vector.load %arg7[%c0_31, %c0_32] : memref<32x1xf32, #tpu.memory_space<vmem>>, vector<32x1xf32>
      %47 = vector.broadcast %46 : vector<32x1xf32> to vector<32x256xf32>
      %48 = arith.addf %45, %47 : vector<32x256xf32>
      %49 = arith.truncf %48 : vector<32x256xf32> to vector<32x256xbf16>
      %c0_33 = arith.constant 0 : index
      %c0_34 = arith.constant 0 : index
      %50 = vector.load %arg11[%c0_33, %c0_34] : memref<40x256xbf16, #tpu.memory_space<vmem>>, vector<32x256xbf16>
      tpu.vector_store %arg11[%c0_33, %c0_34], %49 {strides = array<i32>} : memref<40x256xbf16, #tpu.memory_space<vmem>>, vector<32x256xbf16>,
      %cst_35 = arith.constant 1.000000e+00 : bf16
      %51 = vector.broadcast %cst_35 : bf16 to vector<8x256xbf16>
      %c32 = arith.constant 32 : index
      %c0_36 = arith.constant 0 : index
      %52 = vector.load %arg11[%c32, %c0_36] : memref<40x256xbf16, #tpu.memory_space<vmem>>, vector<8x256xbf16>
      tpu.vector_store %arg11[%c32, %c0_36], %51 {strides = array<i32>} : memref<40x256xbf16, #tpu.memory_space<vmem>>, vector<8x256xbf16>,
    } else {
    }
    %c0 = arith.constant 0 : index
    %c0_1 = arith.constant 0 : index
    %c0_2 = arith.constant 0 : index
    %3 = vector.load %arg2[%c0, %c0_1, %c0_2] : memref<1x32x128xf32, #tpu.memory_space<vmem>>, vector<1x32x128xf32>
    %4 = vector.shape_cast %3 : vector<1x32x128xf32> to vector<32x128xf32>
    %c0_3 = arith.constant 0 : index
    %c0_4 = arith.constant 0 : index
    %5 = vector.load %arg4[%c0_3, %c0_4] : memref<128x32xbf16, #tpu.memory_space<vmem>>, vector<128x32xbf16>
    %6 = arith.truncf %4 : vector<32x128xf32> to vector<32x128xbf16>
    %cst = arith.constant dense<0.000000e+00> : vector<128x128xf32>
    %7 = tpu.matmul %5, %6, %cst {dimension_numbers = #tpu.dot_dimension_numbers<[1], [0], [0], [1], [0, 0, 1, 1], [], []>} : vector<128x32xbf16>, vector<32x128xbf16>, vector<128x128xf32> -> vector<128x128xf32>
    %c0_5 = arith.constant 0 : index
    %c0_6 = arith.constant 0 : index
    %8 = vector.load %arg5[%c0_5, %c0_6] : memref<128x1xf32, #tpu.memory_space<vmem>>, vector<128x1xf32>
    %9 = vector.broadcast %8 : vector<128x1xf32> to vector<128x128xf32>
    %10 = arith.addf %7, %9 : vector<128x128xf32>
    %c0_7 = arith.constant 0 : index
    %c0_8 = arith.constant 0 : index
    %11 = vector.load %arg10[%c0_7, %c0_8] : memref<256x128xbf16, #tpu.memory_space<vmem>>, vector<256x128xbf16>
    %12 = arith.truncf %10 : vector<128x128xf32> to vector<128x128xbf16>
    %cst_9 = arith.constant dense<0.000000e+00> : vector<256x128xf32>
    %13 = tpu.matmul %11, %12, %cst_9 {dimension_numbers = #tpu.dot_dimension_numbers<[1], [0], [0], [1], [0, 0, 1, 1], [], []>} : vector<256x128xbf16>, vector<128x128xbf16>, vector<256x128xf32> -> vector<256x128xf32>
    %cst_10 = arith.constant dense<0xFF800000> : vector<128xf32>
    %14 = vector.multi_reduction <maximumf>, %13, %cst_10 [0] : vector<256x128xf32> to vector<128xf32>
    %15 = vector.shape_cast %14 : vector<128xf32> to vector<1x128xf32>
    %16 = vector.broadcast %15 : vector<1x128xf32> to vector<256x128xf32>
    %17 = arith.subf %13, %16 : vector<256x128xf32>
    %18 = arith.truncf %17 : vector<256x128xf32> to vector<256x128xbf16>
    %19 = math.exp %18 : vector<256x128xbf16>
    %c0_11 = arith.constant 0 : index
    %c0_12 = arith.constant 0 : index
    %20 = vector.load %arg11[%c0_11, %c0_12] : memref<40x256xbf16, #tpu.memory_space<vmem>>, vector<40x256xbf16>
    %cst_13 = arith.constant dense<0.000000e+00> : vector<40x128xf32>
    %21 = tpu.matmul %20, %19, %cst_13 {dimension_numbers = #tpu.dot_dimension_numbers<[1], [0], [0], [1], [0, 0, 1, 1], [], []>} : vector<40x256xbf16>, vector<256x128xbf16>, vector<40x128xf32> -> vector<40x128xf32>
    %22 = vector.extract_strided_slice %21 {offsets = [0, 0], sizes = [32, 128], strides = [1, 1]} : vector<40x128xf32> to vector<32x128xf32>
    %23 = vector.extract_strided_slice %21 {offsets = [32, 0], sizes = [1, 128], strides = [1, 1]} : vector<40x128xf32> to vector<1x128xf32>
    %c0_14 = arith.constant 0 : index
    %24 = memref.load %arg8[%c0_14] : memref<1xf32, #tpu.memory_space<smem>>
    %25 = tpu.reciprocal %23 {approx = true} : vector<1x128xf32> -> vector<1x128xf32>
    %26 = vector.broadcast %24 : f32 to vector<1x128xf32>
    %27 = arith.mulf %26, %25 : vector<1x128xf32>
    %28 = vector.broadcast %27 : vector<1x128xf32> to vector<32x128xf32>
    %29 = arith.mulf %22, %28 : vector<32x128xf32>
    %30 = arith.addf %29, %4 : vector<32x128xf32>
    %c0_15 = arith.constant 0 : index
    %c0_16 = arith.constant 0 : index
    %c0_17 = arith.constant 0 : index
    %31 = vector.load %arg9[%c0_15, %c0_16, %c0_17] : memref<1x32x128xf32, #tpu.memory_space<vmem>>, vector<1x32x128xf32>
    %32 = vector.shape_cast %31 : vector<1x32x128xf32> to vector<32x128xf32>
    %33 = vector.shape_cast %30 : vector<32x128xf32> to vector<1x32x128xf32>
    tpu.vector_store %arg9[%c0_15, %c0_16, %c0_17], %33 {strides = array<i32>} : memref<1x32x128xf32, #tpu.memory_space<vmem>>, vector<1x32x128xf32>,
    return
  }
  func.func @transform_0(%arg0: i32, %arg1: i32) -> (i32, i32, i32) {
    %c0_i32 = arith.constant 0 : i32
    %c0_i32_0 = arith.constant 0 : i32
    return %arg0, %c0_i32, %arg1 : i32, i32, i32
  }
  func.func @transform_1(%arg0: i32, %arg1: i32) -> (i32, i32, i32) {
    %c0_i32 = arith.constant 0 : i32
    %c0_i32_0 = arith.constant 0 : i32
    %c0_i32_1 = arith.constant 0 : i32
    return %arg0, %c0_i32, %c0_i32_0 : i32, i32, i32
  }
  func.func @transform_2(%arg0: i32, %arg1: i32) -> (i32, i32) {
    %c0_i32 = arith.constant 0 : i32
    %c0_i32_0 = arith.constant 0 : i32
    %c0_i32_1 = arith.constant 0 : i32
    return %c0_i32, %c0_i32_0 : i32, i32
  }
  func.func @transform_3(%arg0: i32, %arg1: i32) -> (i32, i32) {
    %c0_i32 = arith.constant 0 : i32
    %c0_i32_0 = arith.constant 0 : i32
    %c0_i32_1 = arith.constant 0 : i32
    return %c0_i32, %c0_i32_0 : i32, i32
  }
  func.func @transform_4(%arg0: i32, %arg1: i32) -> (i32, i32) {
    %c0_i32 = arith.constant 0 : i32
    %c0_i32_0 = arith.constant 0 : i32
    %c0_i32_1 = arith.constant 0 : i32
    return %c0_i32, %c0_i32_0 : i32, i32
  }
  func.func @transform_5(%arg0: i32, %arg1: i32) -> (i32, i32) {
    %c0_i32 = arith.constant 0 : i32
    %c0_i32_0 = arith.constant 0 : i32
    %c0_i32_1 = arith.constant 0 : i32
    return %c0_i32, %c0_i32_0 : i32, i32
  }
  func.func @transform_6(%arg0: i32, %arg1: i32) -> i32 {
    %c0_i32 = arith.constant 0 : i32
    %c0_i32_0 = arith.constant 0 : i32
    return %c0_i32 : i32
  }
  func.func @transform_7(%arg0: i32, %arg1: i32) -> (i32, i32, i32) {
    %c0_i32 = arith.constant 0 : i32
    %c0_i32_0 = arith.constant 0 : i32
    return %arg0, %c0_i32, %arg1 : i32, i32, i32
  }
}

</mosaic_0001>

<llo_original>
// kernel: tpu_custom_call.1
$region0: #{tpu_custom_call.1}
  #allocation0 [shape = 'u32[]', space=smem, size = 0x4, offset = 0x4, fixed_abs, tag = 'smem constant byte address 0x4 - core index']
  #allocation1 [shape = 'u32[144,128]{1,0:T(1,128)}', space=vmem, size = 0x12000, scoped, tag = 'internal scratch']
  #allocation2 [shape = 'bf16[256,128]{1,0:T(16,128)(2,1)}', space=vmem, size = 0x10000, scoped, tag = 'scratch operand']
  #allocation3 [shape = 'bf16[40,256]{1,0:T(8,128)(2,1)}', space=vmem, size = 0x5000, scoped, tag = 'scratch operand']
  #allocation4 [shape = 'f32[1]{0:T(128)S(6)}', space=smem, size = 0x200, scoped, tag = 'scoped memory for tpu_custom_call.1']
  %s0 = inlined_call_operand.hbm [shape: f32[2,32,256], index: 0, kind: input, shape index: {}]
  %s1 = inlined_call_operand.hbm [shape: bf16[2,32,256], index: 1, kind: input, shape index: {}]
  %s2 = inlined_call_operand.hbm [shape: bf16[128,32], index: 2, kind: input, shape index: {}]
  %s3 = inlined_call_operand.hbm [shape: f32[128,1], index: 3, kind: input, shape index: {}]
  %s4 = inlined_call_operand.hbm [shape: bf16[32,32], index: 4, kind: input, shape index: {}]
  %s5 = inlined_call_operand.hbm [shape: f32[32,1], index: 5, kind: input, shape index: {}]
  %s6 = inlined_call_operand.<no memory space> [shape: f32[1], index: 6, kind: input, shape index: {}]
  %s7 = inlined_call_operand.hbm [shape: f32[2,32,256], index: 7, kind: output, shape index: {}]
  %s8 = sld [smem:[#allocation0]]
  $region89: #{tpu_custom_call.1} parent=0
    _
  %s10 = ssub.s32 1, %s8
  %s11 = scalar_select 0, %s10, %s8
  %12 = sst [smem:[#allocation4]] %s6
  $region1: #{tpu_custom_call.1} parent=0
    #allocation5 [shape = 'u8[32768]{0}', space=vmem, size = 0x8000, scoped, tag = 'input window, operand 0']
    #allocation6 [shape = 's32[2]{0}', space=sflag, size = 0x8, scoped, tag = 'scoped memory for tpu_custom_call.1']
    #allocation7 [shape = 's32[2]{0}', space=sflag, size = 0x8, scoped, tag = 'scoped memory for tpu_custom_call.1']
    #allocation8 [shape = 'u8[16384]{0}', space=vmem, size = 0x4000, scoped, tag = 'input window, operand 1, single buffered']
    #allocation9 [shape = 's32[1]{0}', space=sflag, size = 0x4, scoped, tag = 'scoped memory for tpu_custom_call.1']
    #allocation10 [shape = 'u8[32768]{0}', space=vmem, size = 0x8000, scoped, tag = 'input window, operand 2, single buffered']
    #allocation11 [shape = 'u8[65536]{0}', space=vmem, size = 0x10000, scoped, tag = 'input window, operand 3, single buffered']
    #allocation12 [shape = 's32[1]{0}', space=sflag, size = 0x4, scoped, tag = 'scoped memory for tpu_custom_call.1']
    #allocation13 [shape = 'u8[8192]{0}', space=vmem, size = 0x2000, scoped, tag = 'input window, operand 4, single buffered']
    #allocation14 [shape = 'u8[16384]{0}', space=vmem, size = 0x4000, scoped, tag = 'input window, operand 5, single buffered']
    #allocation15 [shape = 's32[1]{0}', space=sflag, size = 0x4, scoped, tag = 'scoped memory for tpu_custom_call.1']
    #allocation16 [shape = 'u8[32768]{0}', space=vmem, size = 0x8000, scoped, tag = 'output window, operand 0']
    %13 = vsyncpa [#allocation6], 0
    %s14 = scalar_lea.sflag [#allocation6], 1
    %15 = vsyncpa %s14, 0
    %16 = vsyncpa [#allocation9], 0
    %17 = vsyncpa [#allocation12], 0
    %18 = vsyncpa [#allocation15], 0
    %19 = vsyncpa [#allocation7], 0
    %s20 = scalar_lea.sflag [#allocation7], 1
    %21 = vsyncpa %s20, 0
    loop: start=0, step=1, limit=6
    $region2: #{tpu_custom_call.1} parent=1 // loop_pre_header
      _
    $region3: #{tpu_custom_call.1} parent=1 // loop_header
      %s23 = sphi 0, %s27
      %p24 = scmp.ge.s32.totalorder %s23, 6
      %s30 = sphi 0, %s42
      %s31 = sphi 0, %s38
      %s32 = sphi 0, %s30
      %s33 = sphi 0, %s31
      %s34 = sphi 0, %s32
      %s35 = sphi 0, %s33
      %s47 = sphi 0, %s49
      %s50 = sphi 0, %s47
      %s51 = sphi 0, %s50
      %s67 = sphi 0, %s51
      %s73 = sphi 0, %s75
      %s76 = sphi 0, %s73
      %s77 = sphi 0, %s76
      %s93 = sphi 0, %s77
      %s97 = sphi 0, %s97
      %s99 = sphi 0, %s97
      %s100 = sphi 0, %s99
      %s114 = sphi 0, %s100
      %s118 = sphi 0, %s118
      %s120 = sphi 0, %s118
      %s121 = sphi 0, %s120
      %s135 = sphi 0, %s121
      %s139 = sphi 0, %s139
      %s141 = sphi 0, %s139
      %s142 = sphi 0, %s141
      %s156 = sphi 0, %s142
      %s160 = sphi 0, %s160
      %s162 = sphi 0, %s160
      %s163 = sphi 0, %s162
      %s177 = sphi 0, %s163
      %s181 = sphi 0, %s181
      %s183 = sphi 0, %s181
      %s184 = sphi 0, %s183
      %s198 = sphi 0, %s184
      %s206 = sphi 0, %s208
      %s209 = sphi 0, %s206
      %s210 = sphi 0, %s209
      %s226 = sphi 0, %s210
    $region4: #{tpu_custom_call.1} parent=1 // loop_header_branch
      %26 = sbr.rel (%p24) target = $region8
    $region5: #{tpu_custom_call.1} parent=1 // loop_body
      %s28 = ssub.s32 %s23, 1
      %s29 = ssub.s32 %s23, 2
      %s36 = sadd.s32 1, %s31
      %p37 = scmp.ge.s32.totalorder %s36, 2
      %s38 = scalar_select %p37, 0, %s36
      %s39 = sadd.s32 1, %s30
      %s40 = scalar_select %p37, %s39, %s30
      %p41 = scmp.ge.s32.totalorder %s40, 2
      %s42 = scalar_select %p41, 0, %s40
      %s43 = ssub.s32 %s30, %s42
      %s44 = ssub.s32 %s31, %s38
      %s45 = sor.u32 %s43, %s44
      %p46 = scmp.eq.s32.totalorder %s45, 0
      %s48 = sadd.s32 %s47, 1
      %s49 = scalar_select %p46, %s47, %s48
      %p52 = pneg %p46
      %p53 = scmp.eq.s32.totalorder %s23, 3
      %p54 = por %p52, %p53
      %p55 = scmp.ne.s32.totalorder %s47, %s50
      %p56 = scmp.eq.s32.totalorder %s23, 0
      %p57 = por %p55, %p56
      %p58 = scmp.ne.s32.totalorder %s47, %s50
      %p59 = scmp.eq.s32.totalorder %s28, 3
      %p60 = por %p58, %p59
      %p61 = scmp.ne.s32.totalorder %s50, %s51
      %p62 = scmp.eq.s32.totalorder %s28, 0
      %p63 = por %p61, %p62
      %p64 = scmp.ne.s32.totalorder %s50, %s51
      %p65 = scmp.eq.s32.totalorder %s29, 3
      %p66 = por %p64, %p65
      %p68 = scmp.ne.s32.totalorder %s51, %s67
      %p69 = scmp.eq.s32.totalorder %s29, 0
      %p70 = por %p68, %p69
      %s71 = ssub.s32 %s30, %s42
      %p72 = scmp.eq.s32.totalorder %s71, 0
      %s74 = sadd.s32 %s73, 1
      %s75 = scalar_select %p72, %s73, %s74
      %p78 = pneg %p72
      %p79 = scmp.eq.s32.totalorder %s23, 3
      %p80 = por %p78, %p79
      %p81 = scmp.ne.s32.totalorder %s73, %s76
      %p82 = scmp.eq.s32.totalorder %s23, 0
      %p83 = por %p81, %p82
      %p84 = scmp.ne.s32.totalorder %s73, %s76
      %p85 = scmp.eq.s32.totalorder %s28, 3
      %p86 = por %p84, %p85
      %p87 = scmp.ne.s32.totalorder %s76, %s77
      %p88 = scmp.eq.s32.totalorder %s28, 0
      %p89 = por %p87, %p88
      %p90 = scmp.ne.s32.totalorder %s76, %s77
      %p91 = scmp.eq.s32.totalorder %s29, 3
      %p92 = por %p90, %p91
      %p94 = scmp.ne.s32.totalorder %s77, %s93
      %p95 = scmp.eq.s32.totalorder %s29, 0
      %p96 = por %p94, %p95
      %s98 = sadd.s32 %s97, 1
      %p101 = scmp.eq.s32.totalorder %s23, 3
      %p102 = scmp.ne.s32.totalorder %s97, %s99
      %p103 = scmp.eq.s32.totalorder %s23, 0
      %p104 = por %p102, %p103
      %p105 = scmp.ne.s32.totalorder %s97, %s99
      %p106 = scmp.eq.s32.totalorder %s28, 3
      %p107 = por %p105, %p106
      %p108 = scmp.ne.s32.totalorder %s99, %s100
      %p109 = scmp.eq.s32.totalorder %s28, 0
      %p110 = por %p108, %p109
      %p111 = scmp.ne.s32.totalorder %s99, %s100
      %p112 = scmp.eq.s32.totalorder %s29, 3
      %p113 = por %p111, %p112
      %p115 = scmp.ne.s32.totalorder %s100, %s114
      %p116 = scmp.eq.s32.totalorder %s29, 0
      %p117 = por %p115, %p116
      %s119 = sadd.s32 %s118, 1
      %p122 = scmp.eq.s32.totalorder %s23, 3
      %p123 = scmp.ne.s32.totalorder %s118, %s120
      %p124 = scmp.eq.s32.totalorder %s23, 0
      %p125 = por %p123, %p124
      %p126 = scmp.ne.s32.totalorder %s118, %s120
      %p127 = scmp.eq.s32.totalorder %s28, 3
      %p128 = por %p126, %p127
      %p129 = scmp.ne.s32.totalorder %s120, %s121
      %p130 = scmp.eq.s32.totalorder %s28, 0
      %p131 = por %p129, %p130
      %p132 = scmp.ne.s32.totalorder %s120, %s121
      %p133 = scmp.eq.s32.totalorder %s29, 3
      %p134 = por %p132, %p133
      %p136 = scmp.ne.s32.totalorder %s121, %s135
      %p137 = scmp.eq.s32.totalorder %s29, 0
      %p138 = por %p136, %p137
      %s140 = sadd.s32 %s139, 1
      %p143 = scmp.eq.s32.totalorder %s23, 3
      %p144 = scmp.ne.s32.totalorder %s139, %s141
      %p145 = scmp.eq.s32.totalorder %s23, 0
      %p146 = por %p144, %p145
      %p147 = scmp.ne.s32.totalorder %s139, %s141
      %p148 = scmp.eq.s32.totalorder %s28, 3
      %p149 = por %p147, %p148
      %p150 = scmp.ne.s32.totalorder %s141, %s142
      %p151 = scmp.eq.s32.totalorder %s28, 0
      %p152 = por %p150, %p151
      %p153 = scmp.ne.s32.totalorder %s141, %s142
      %p154 = scmp.eq.s32.totalorder %s29, 3
      %p155 = por %p153, %p154
      %p157 = scmp.ne.s32.totalorder %s142, %s156
      %p158 = scmp.eq.s32.totalorder %s29, 0
      %p159 = por %p157, %p158
      %s161 = sadd.s32 %s160, 1
      %p164 = scmp.eq.s32.totalorder %s23, 3
      %p165 = scmp.ne.s32.totalorder %s160, %s162
      %p166 = scmp.eq.s32.totalorder %s23, 0
      %p167 = por %p165, %p166
      %p168 = scmp.ne.s32.totalorder %s160, %s162
      %p169 = scmp.eq.s32.totalorder %s28, 3
      %p170 = por %p168, %p169
      %p171 = scmp.ne.s32.totalorder %s162, %s163
      %p172 = scmp.eq.s32.totalorder %s28, 0
      %p173 = por %p171, %p172
      %p174 = scmp.ne.s32.totalorder %s162, %s163
      %p175 = scmp.eq.s32.totalorder %s29, 3
      %p176 = por %p174, %p175
      %p178 = scmp.ne.s32.totalorder %s163, %s177
      %p179 = scmp.eq.s32.totalorder %s29, 0
      %p180 = por %p178, %p179
      %s182 = sadd.s32 %s181, 1
      %p185 = scmp.eq.s32.totalorder %s23, 3
      %p186 = scmp.ne.s32.totalorder %s181, %s183
      %p187 = scmp.eq.s32.totalorder %s23, 0
      %p188 = por %p186, %p187
      %p189 = scmp.ne.s32.totalorder %s181, %s183
      %p190 = scmp.eq.s32.totalorder %s28, 3
      %p191 = por %p189, %p190
      %p192 = scmp.ne.s32.totalorder %s183, %s184
      %p193 = scmp.eq.s32.totalorder %s28, 0
      %p194 = por %p192, %p193
      %p195 = scmp.ne.s32.totalorder %s183, %s184
      %p196 = scmp.eq.s32.totalorder %s29, 3
      %p197 = por %p195, %p196
      %p199 = scmp.ne.s32.totalorder %s184, %s198
      %p200 = scmp.eq.s32.totalorder %s29, 0
      %p201 = por %p199, %p200
      %s202 = ssub.s32 %s30, %s42
      %s203 = ssub.s32 %s31, %s38
      %s204 = sor.u32 %s202, %s203
      %p205 = scmp.eq.s32.totalorder %s204, 0
      %s207 = sadd.s32 %s206, 1
      %s208 = scalar_select %p205, %s206, %s207
      %p211 = pneg %p205
      %p212 = scmp.eq.s32.totalorder %s23, 3
      %p213 = por %p211, %p212
      %p214 = scmp.ne.s32.totalorder %s206, %s209
      %p215 = scmp.eq.s32.totalorder %s23, 0
      %p216 = por %p214, %p215
      %p217 = scmp.ne.s32.totalorder %s206, %s209
      %p218 = scmp.eq.s32.totalorder %s28, 3
      %p219 = por %p217, %p218
      %p220 = scmp.ne.s32.totalorder %s209, %s210
      %p221 = scmp.eq.s32.totalorder %s28, 0
      %p222 = por %p220, %p221
      %p223 = scmp.ne.s32.totalorder %s209, %s210
      %p224 = scmp.eq.s32.totalorder %s29, 3
      %p225 = por %p223, %p224
      %p227 = scmp.ne.s32.totalorder %s210, %s226
      %p228 = scmp.eq.s32.totalorder %s29, 0
      %p229 = por %p227, %p228
      %p230 = scmp.le.s32.totalorder 1, %s23
      %p231 = scmp.lt.s32.totalorder %s23, 5
      %p232 = pnand %p230, %p231
      %p233 = pneg %p232
      // Predicated region
      $region9: #{tpu_custom_call.1} parent=5 // pred_check
        _
      $region10: #{tpu_custom_call.1} parent=5 // pred_check_branch
        %235 = sbr.rel (%p232) target = $region12
      $region11: #{tpu_custom_call.1} parent=5 // pred_region
        %s236 = ssub.s32 %s23, 1
        // Predicated region
        $region13: #{tpu_custom_call.1} parent=11 // pred_check
          %p237 = pneg %p89
        $region14: #{tpu_custom_call.1} parent=11 // pred_check_branch
          %239 = sbr.rel (%p237) target = $region16
        $region15: #{tpu_custom_call.1} parent=11 // pred_region
          %s241 = ssub.s32 512, 512
          %242 = vsyncadd [#allocation9], %s241
          %s243 = smul.addr %s32, 8
          %s244 = smul.addr %s243, 64
          %s245 = scalar_lea.hbm %s1, %s244
          %s246 = sshll.u32 [#allocation8], 4
          %s247 = int_to_ptr.vmem [resolvable:$true] %s246
          %252 = dma.hbm_to_vmem [thread:$0]  %s245, 512, %s247, [#allocation9], 128, 128, 8
        $region16: #{tpu_custom_call.1} parent=11 // pred_fallthru
          _
        // Predicated region
        $region17: #{tpu_custom_call.1} parent=11 // pred_check
          %p253 = pneg %p110
        $region18: #{tpu_custom_call.1} parent=11 // pred_check_branch
          %255 = sbr.rel (%p253) target = $region20
        $region19: #{tpu_custom_call.1} parent=11 // pred_region
          %s257 = ssub.s32 1024, 1024
          %258 = vsyncadd [#allocation9], %s257
          %s259 = sshll.u32 [#allocation10], 4
          %s260 = int_to_ptr.vmem [resolvable:$true] %s259
          %265 = dma.hbm_to_vmem [thread:$0]  %s2, 1024, %s260, [#allocation9], 64, 64, 4
        $region20: #{tpu_custom_call.1} parent=11 // pred_fallthru
          _
        // Predicated region
        $region21: #{tpu_custom_call.1} parent=11 // pred_check
          %p266 = pneg %p131
        $region22: #{tpu_custom_call.1} parent=11 // pred_check_branch
          %268 = sbr.rel (%p266) target = $region24
        $region23: #{tpu_custom_call.1} parent=11 // pred_region
          %s270 = ssub.s32 2048, 2048
          %271 = vsyncadd [#allocation12], %s270
          %s272 = sshll.u32 [#allocation11], 4
          %s273 = int_to_ptr.vmem [resolvable:$true] %s272
          %278 = dma.hbm_to_vmem [thread:$0]  %s3, 2048, %s273, [#allocation12], 128, 128, 8
        $region24: #{tpu_custom_call.1} parent=11 // pred_fallthru
          _
        // Predicated region
        $region25: #{tpu_custom_call.1} parent=11 // pred_check
          %p279 = pneg %p152
        $region26: #{tpu_custom_call.1} parent=11 // pred_check_branch
          %281 = sbr.rel (%p279) target = $region28
        $region27: #{tpu_custom_call.1} parent=11 // pred_region
          %s283 = ssub.s32 256, 256
          %284 = vsyncadd [#allocation12], %s283
          %s285 = sshll.u32 [#allocation13], 4
          %s286 = int_to_ptr.vmem [resolvable:$true] %s285
          %291 = dma.hbm_to_vmem [thread:$0]  %s4, 256, %s286, [#allocation12], 64, 64, 4
        $region28: #{tpu_custom_call.1} parent=11 // pred_fallthru
          _
        // Predicated region
        $region29: #{tpu_custom_call.1} parent=11 // pred_check
          %p292 = pneg %p173
        $region30: #{tpu_custom_call.1} parent=11 // pred_check_branch
          %294 = sbr.rel (%p292) target = $region32
        $region31: #{tpu_custom_call.1} parent=11 // pred_region
          %s296 = ssub.s32 512, 512
          %297 = vsyncadd [#allocation15], %s296
          %s298 = sshll.u32 [#allocation14], 4
          %s299 = int_to_ptr.vmem [resolvable:$true] %s298
          %304 = dma.hbm_to_vmem [thread:$0]  %s5, 512, %s299, [#allocation15], 128, 128, 8
        $region32: #{tpu_custom_call.1} parent=11 // pred_fallthru
          _
        // Predicated region
        $region33: #{tpu_custom_call.1} parent=11 // pred_check
          %p305 = pneg %p194
        $region34: #{tpu_custom_call.1} parent=11 // pred_check_branch
          %307 = sbr.rel (%p305) target = $region36
        $region35: #{tpu_custom_call.1} parent=11 // pred_region
          _
        $region36: #{tpu_custom_call.1} parent=11 // pred_fallthru
          _
      $region12: #{tpu_custom_call.1} parent=5 // pred_fallthru
        _
      %p308 = scmp.lt.s32.totalorder %s23, 4
      // Predicated region
      $region37: #{tpu_custom_call.1} parent=5 // pred_check
        %p309 = pneg %p308
      $region38: #{tpu_custom_call.1} parent=5 // pred_check_branch
        %311 = sbr.rel (%p309) target = $region40
      $region39: #{tpu_custom_call.1} parent=5 // pred_region
        // Predicated region
        $region41: #{tpu_custom_call.1} parent=39 // pred_check
          %p312 = pneg %p57
        $region42: #{tpu_custom_call.1} parent=39 // pred_check_branch
          %314 = sbr.rel (%p312) target = $region44
        $region43: #{tpu_custom_call.1} parent=39 // pred_region
          %s315 = sand.u32 %s47, 1
          %s316 = scalar_lea.sflag [#allocation6], %s315
          %s317 = sand.u32 %s47, 1
          %s318 = smul.addr %s317, 32
          %s319 = scalar_lea.vmem [#allocation5], %s318
          %s321 = ssub.s32 512, 512
          %322 = vsyncadd %s316, %s321
          %s323 = smul.addr %s30, 8
          %s324 = sadd.s32 %s31, %s323
          %s325 = smul.addr %s324, 128
          %s326 = scalar_lea.hbm %s0, %s325
          %s327 = sshll.u32 %s319, 4
          %s328 = int_to_ptr.vmem [resolvable:$true] %s327
          %333 = dma.hbm_to_vmem [thread:$0]  %s326, 512, %s328, %s316, 256, 128, 8
        $region44: #{tpu_custom_call.1} parent=39 // pred_fallthru
          _
      $region40: #{tpu_custom_call.1} parent=5 // pred_fallthru
        _
      %p334 = scmp.le.s32.totalorder 1, %s23
      %p335 = scmp.lt.s32.totalorder %s23, 5
      %p336 = pnand %p334, %p335
      %p337 = pneg %p336
      // Predicated region
      $region45: #{tpu_custom_call.1} parent=5 // pred_check
        _
      $region46: #{tpu_custom_call.1} parent=5 // pred_check_branch
        %339 = sbr.rel (%p336) target = $region48
      $region47: #{tpu_custom_call.1} parent=5 // pred_region
        %s340 = ssub.s32 %s23, 1
        %s341 = sand.u32 %s50, 1
        %s342 = scalar_lea.sflag [#allocation6], %s341
        %s343 = sand.u32 %s50, 1
        %s344 = smul.addr %s343, 32
        %s345 = scalar_lea.vmem [#allocation5], %s344
        // Predicated region
        $region49: #{tpu_custom_call.1} parent=47 // pred_check
          %p346 = pneg %p63
        $region50: #{tpu_custom_call.1} parent=47 // pred_check_branch
          %348 = sbr.rel (%p346) target = $region52
        $region51: #{tpu_custom_call.1} parent=47 // pred_region
          %349 = dma.done %s342, 512
        $region52: #{tpu_custom_call.1} parent=47 // pred_fallthru
          _
        // Predicated region
        $region53: #{tpu_custom_call.1} parent=47 // pred_check
          %p350 = pneg %p89
        $region54: #{tpu_custom_call.1} parent=47 // pred_check_branch
          %352 = sbr.rel (%p350) target = $region56
        $region55: #{tpu_custom_call.1} parent=47 // pred_region
          %353 = dma.done [#allocation9], 512
        $region56: #{tpu_custom_call.1} parent=47 // pred_fallthru
          _
        // Predicated region
        $region57: #{tpu_custom_call.1} parent=47 // pred_check
          %p354 = pneg %p110
        $region58: #{tpu_custom_call.1} parent=47 // pred_check_branch
          %356 = sbr.rel (%p354) target = $region60
        $region59: #{tpu_custom_call.1} parent=47 // pred_region
          %357 = dma.done [#allocation9], 1024
        $region60: #{tpu_custom_call.1} parent=47 // pred_fallthru
          _
        // Predicated region
        $region61: #{tpu_custom_call.1} parent=47 // pred_check
          %p358 = pneg %p131
        $region62: #{tpu_custom_call.1} parent=47 // pred_check_branch
          %360 = sbr.rel (%p358) target = $region64
        $region63: #{tpu_custom_call.1} parent=47 // pred_region
          %361 = dma.done [#allocation12], 2048
        $region64: #{tpu_custom_call.1} parent=47 // pred_fallthru
          _
        // Predicated region
        $region65: #{tpu_custom_call.1} parent=47 // pred_check
          %p362 = pneg %p152
        $region66: #{tpu_custom_call.1} parent=47 // pred_check_branch
          %364 = sbr.rel (%p362) target = $region68
        $region67: #{tpu_custom_call.1} parent=47 // pred_region
          %365 = dma.done [#allocation12], 256
        $region68: #{tpu_custom_call.1} parent=47 // pred_fallthru
          _
        // Predicated region
        $region69: #{tpu_custom_call.1} parent=47 // pred_check
          %p366 = pneg %p173
        $region70: #{tpu_custom_call.1} parent=47 // pred_check_branch
          %368 = sbr.rel (%p366) target = $region72
        $region71: #{tpu_custom_call.1} parent=47 // pred_region
          %369 = dma.done [#allocation15], 512
        $region72: #{tpu_custom_call.1} parent=47 // pred_fallthru
          _
        %s370 = sand.u32 %s50, 1
        %s371 = scalar_lea.sflag [#allocation6], %s370
        %s372 = sand.u32 %s50, 1
        %s373 = smul.addr %s372, 32
        %s374 = scalar_lea.vmem [#allocation5], %s373
        %p375 = pneg %p63
        %p376 = pneg %p60
        %p377 = pneg %p89
        %p378 = pneg %p86
        %p379 = pneg %p110
        %p380 = pneg %p107
        %p381 = pneg %p131
        %p382 = pneg %p128
        %p383 = pneg %p152
        %p384 = pneg %p149
        %p385 = pneg %p173
        %p386 = pneg %p170
        %p387 = pneg %p194
        %p388 = pneg %p191
        %p389 = pneg %p222
        %p390 = pneg %p219
        %s391 = sand.u32 %s209, 1
        %s392 = scalar_lea.sflag [#allocation7], %s391
        %s393 = sand.u32 %s209, 1
        %s394 = smul.addr %s393, 32
        %s395 = scalar_lea.vmem [#allocation16], %s394
        %p398 = scmp.eq.s32.totalorder %s33, 0
        // Predicated region
        $region73: #{tpu_custom_call.1} parent=47 // pred_check
          %p399 = pneg %p398
        $region74: #{tpu_custom_call.1} parent=47 // pred_check_branch
          %401 = sbr.rel (%p399) target = $region76
        $region75: #{tpu_custom_call.1} parent=47 // pred_region
          %v402 = vld [vmem:[#allocation8] sm:$0xff]
          %v403 = vld [vmem:[#allocation8 + $0x8] sm:$0xff]
          %v404 = vld [vmem:[#allocation8 + $0x10] sm:$0xff]
          %v405 = vld [vmem:[#allocation8 + $0x18] sm:$0xff]
          %v406 = vld [vmem:[#allocation10] sm:$0xf]
          %v407 = vld [vmem:[#allocation10 + $0x4] sm:$0xf]
          %v408 = vld [vmem:[#allocation10 + $0x8] sm:$0xf]
          %v409 = vld [vmem:[#allocation10 + $0xc] sm:$0xf]
          %v410 = vld [vmem:[#allocation10 + $0x10] sm:$0xf]
          %v411 = vld [vmem:[#allocation10 + $0x14] sm:$0xf]
          %v412 = vld [vmem:[#allocation10 + $0x18] sm:$0xf]
          %v413 = vld [vmem:[#allocation10 + $0x1c] sm:$0xf]
          %v414 = vld [vmem:[#allocation10 + $0x20] sm:$0xf]
          %v415 = vld [vmem:[#allocation10 + $0x24] sm:$0xf]
          %v416 = vld [vmem:[#allocation10 + $0x28] sm:$0xf]
          %v417 = vld [vmem:[#allocation10 + $0x2c] sm:$0xf]
          %v418 = vld [vmem:[#allocation10 + $0x30] sm:$0xf]
          %v419 = vld [vmem:[#allocation10 + $0x34] sm:$0xf]
          %v420 = vld [vmem:[#allocation10 + $0x38] sm:$0xf]
          %v421 = vld [vmem:[#allocation10 + $0x3c] sm:$0xf]
          %v422 = vld [vmem:[#allocation11] sm:$0xff]
          %v423 = vld [vmem:[#allocation11 + $0x8] sm:$0xff]
          %v424 = vld [vmem:[#allocation11 + $0x10] sm:$0xff]
          %v425 = vld [vmem:[#allocation11 + $0x18] sm:$0xff]
          %v426 = vld [vmem:[#allocation11 + $0x20] sm:$0xff]
          %v427 = vld [vmem:[#allocation11 + $0x28] sm:$0xff]
          %v428 = vld [vmem:[#allocation11 + $0x30] sm:$0xff]
          %v429 = vld [vmem:[#allocation11 + $0x38] sm:$0xff]
          %v430 = vld [vmem:[#allocation11 + $0x40] sm:$0xff]
          %v431 = vld [vmem:[#allocation11 + $0x48] sm:$0xff]
          %v432 = vld [vmem:[#allocation11 + $0x50] sm:$0xff]
          %v433 = vld [vmem:[#allocation11 + $0x58] sm:$0xff]
          %v434 = vld [vmem:[#allocation11 + $0x60] sm:$0xff]
          %v435 = vld [vmem:[#allocation11 + $0x68] sm:$0xff]
          %v436 = vld [vmem:[#allocation11 + $0x70] sm:$0xff]
          %v437 = vld [vmem:[#allocation11 + $0x78] sm:$0xff]
          %439 = vset.pattern.permute.xlu0 0
          %440 = vperm.xlu0 %439, %v422
          %v441 = vpop.permute.xlu0 %440
          %444 = vset.pattern.permute.xlu0 0
          %445 = vperm.xlu0 %444, %v423
          %v446 = vpop.permute.xlu0 %445
          %449 = vset.pattern.permute.xlu0 0
          %450 = vperm.xlu0 %449, %v424
          %v451 = vpop.permute.xlu0 %450
          %454 = vset.pattern.permute.xlu0 0
          %455 = vperm.xlu0 %454, %v425
          %v456 = vpop.permute.xlu0 %455
          %459 = vset.pattern.permute.xlu0 0
          %460 = vperm.xlu0 %459, %v426
          %v461 = vpop.permute.xlu0 %460
          %464 = vset.pattern.permute.xlu0 0
          %465 = vperm.xlu0 %464, %v427
          %v466 = vpop.permute.xlu0 %465
          %469 = vset.pattern.permute.xlu0 0
          %470 = vperm.xlu0 %469, %v428
          %v471 = vpop.permute.xlu0 %470
          %474 = vset.pattern.permute.xlu0 0
          %475 = vperm.xlu0 %474, %v429
          %v476 = vpop.permute.xlu0 %475
          %479 = vset.pattern.permute.xlu0 0
          %480 = vperm.xlu0 %479, %v430
          %v481 = vpop.permute.xlu0 %480
          %484 = vset.pattern.permute.xlu0 0
          %485 = vperm.xlu0 %484, %v431
          %v486 = vpop.permute.xlu0 %485
          %489 = vset.pattern.permute.xlu0 0
          %490 = vperm.xlu0 %489, %v432
          %v491 = vpop.permute.xlu0 %490
          %494 = vset.pattern.permute.xlu0 0
          %495 = vperm.xlu0 %494, %v433
          %v496 = vpop.permute.xlu0 %495
          %499 = vset.pattern.permute.xlu0 0
          %500 = vperm.xlu0 %499, %v434
          %v501 = vpop.permute.xlu0 %500
          %504 = vset.pattern.permute.xlu0 0
          %505 = vperm.xlu0 %504, %v435
          %v506 = vpop.permute.xlu0 %505
          %509 = vset.pattern.permute.xlu0 0
          %510 = vperm.xlu0 %509, %v436
          %v511 = vpop.permute.xlu0 %510
          %514 = vset.pattern.permute.xlu0 0
          %515 = vperm.xlu0 %514, %v437
          %v516 = vpop.permute.xlu0 %515
          %v534 = vunpack.c.l.b16 %v406
          %v535 = vunpack.c.l.b16 %v407
          %v536 = vunpack.c.l.b16 %v408
          %v537 = vunpack.c.l.b16 %v409
          %v538 = vunpack.c.l.b16 %v410
          %v539 = vunpack.c.l.b16 %v411
          %v540 = vunpack.c.l.b16 %v412
          %v541 = vunpack.c.l.b16 %v413
          %v542 = vunpack.c.l.b16 %v414
          %v543 = vunpack.c.l.b16 %v415
          %v544 = vunpack.c.l.b16 %v416
          %v545 = vunpack.c.l.b16 %v417
          %v546 = vunpack.c.l.b16 %v418
          %v547 = vunpack.c.l.b16 %v419
          %v548 = vunpack.c.l.b16 %v420
          %v549 = vunpack.c.l.b16 %v421
          %v550 = vpack.c.b16 %v535, %v534
          %v551 = vpack.c.b16 %v537, %v536
          %v552 = vpack.c.b16 %v539, %v538
          %v553 = vpack.c.b16 %v541, %v540
          %v554 = vpack.c.b16 %v543, %v542
          %v555 = vpack.c.b16 %v545, %v544
          %v556 = vpack.c.b16 %v547, %v546
          %v557 = vpack.c.b16 %v549, %v548
          %v562 = vunpack.c.l.b16 %v402
          %v563 = vunpack.c.h.b16 %v402
          %v564 = vunpack.c.l.b16 %v403
          %v565 = vunpack.c.h.b16 %v403
          %v566 = vunpack.c.l.b16 %v404
          %v567 = vunpack.c.h.b16 %v404
          %v568 = vunpack.c.l.b16 %v405
          %v569 = vunpack.c.h.b16 %v405
          %v570 = vpack.c.b16 %v564, %v562
          %v571 = vpack.c.b16 %v565, %v563
          %v572 = vpack.c.b16 %v568, %v566
          %v573 = vpack.c.b16 %v569, %v567
          %vm578 = vcmask 261120
          %v580 = vsel %vm578, %v550, 0
          %v583 = vsel %vm578, %v551, 0
          %v586 = vsel %vm578, %v552, 0
          %v589 = vsel %vm578, %v553, 0
          %v592 = vsel %vm578, %v554, 0
          %v595 = vsel %vm578, %v555, 0
          %v598 = vsel %vm578, %v556, 0
          %v601 = vsel %vm578, %v557, 0
          %603 = vmatprep.subr.bf16.mxu0 %v571
          %604 = vmatpush1.bf16.msra.mxu0 %v570
          %605 = vmatprep.subr.bf16.mxu0 %v573
          %606 = vmatpush1.bf16.msra.mxu0 %v572
          %607 = vmatprep.subr.bf16.mxu0 0
          %608 = vmatpush1.bf16.msra.mxu0 0
          %609 = vmatprep.subr.bf16.mxu0 0
          %610 = vmatpush1.bf16.msra.mxu0 0
          %611 = vmatprep.subr.bf16.mxu0 0
          %612 = vmatpush1.bf16.msra.mxu0 0
          %613 = vmatprep.subr.bf16.mxu0 0
          %614 = vmatpush1.bf16.msra.mxu0 0
          %615 = vmatprep.subr.bf16.mxu0 0
          %616 = vmatpush1.bf16.msra.mxu0 0
          %617 = vmatprep.subr.bf16.mxu0 0
          %618 = vmatpush1.bf16.msra.mxu0 0
          %619 = vmatprep.subr.bf16.mxu0 0
          %620 = vmatpush1.bf16.msra.mxu0 0
          %621 = vmatprep.subr.bf16.mxu0 0
          %622 = vmatpush1.bf16.msra.mxu0 0
          %623 = vmatprep.subr.bf16.mxu0 0
          %624 = vmatpush1.bf16.msra.mxu0 0
          %625 = vmatprep.subr.bf16.mxu0 0
          %626 = vmatpush1.bf16.msra.mxu0 0
          %627 = vmatprep.subr.bf16.mxu0 0
          %628 = vmatpush1.bf16.msra.mxu0 0
          %629 = vmatprep.subr.bf16.mxu0 0
          %630 = vmatpush1.bf16.msra.mxu0 0
          %631 = vmatprep.subr.bf16.mxu0 0
          %632 = vmatpush1.bf16.msra.mxu0 0
          %633 = vmatprep.subr.bf16.mxu0 0
          %634 = vmatpush1.bf16.msra.mxu0 0
          %635 = vmatprep.mubr.bf16.mxu0 0
          %636 = vmatmul.mubr.bf16.gmra.mrb[0].mxu0 %v580
          %v637 = vpop.f32.mrb[0].mxu0
          %v638 = vadd.f32 %v441, %v637
          %v639 = vpop.f32.mrb[0].mxu0
          %v640 = vadd.f32 %v441, %v639
          %v641 = vpop.f32.mrb[0].mxu0
          %v642 = vadd.f32 %v446, %v641
          %v643 = vpop.f32.mrb[0].mxu0
          %v644 = vadd.f32 %v446, %v643
          %645 = vmatprep.mubr.bf16.mxu0 0
          %646 = vmatmul.mubr.bf16.gmra.mrb[0].mxu0 %v583
          %v647 = vpop.f32.mrb[0].mxu0
          %v648 = vadd.f32 %v451, %v647
          %v649 = vpop.f32.mrb[0].mxu0
          %v650 = vadd.f32 %v451, %v649
          %v651 = vpop.f32.mrb[0].mxu0
          %v652 = vadd.f32 %v456, %v651
          %v653 = vpop.f32.mrb[0].mxu0
          %v654 = vadd.f32 %v456, %v653
          %655 = vmatprep.mubr.bf16.mxu0 0
          %656 = vmatmul.mubr.bf16.gmra.mrb[0].mxu0 %v586
          %v657 = vpop.f32.mrb[0].mxu0
          %v658 = vadd.f32 %v461, %v657
          %v659 = vpop.f32.mrb[0].mxu0
          %v660 = vadd.f32 %v461, %v659
          %v661 = vpop.f32.mrb[0].mxu0
          %v662 = vadd.f32 %v466, %v661
          %v663 = vpop.f32.mrb[0].mxu0
          %v664 = vadd.f32 %v466, %v663
          %665 = vmatprep.mubr.bf16.mxu0 0
          %666 = vmatmul.mubr.bf16.gmra.mrb[0].mxu0 %v589
          %v667 = vpop.f32.mrb[0].mxu0
          %v668 = vadd.f32 %v471, %v667
          %v669 = vpop.f32.mrb[0].mxu0
          %v670 = vadd.f32 %v471, %v669
          %v671 = vpop.f32.mrb[0].mxu0
          %v672 = vadd.f32 %v476, %v671
          %v673 = vpop.f32.mrb[0].mxu0
          %v674 = vadd.f32 %v476, %v673
          %675 = vmatprep.mubr.bf16.mxu0 0
          %676 = vmatmul.mubr.bf16.gmra.mrb[0].mxu0 %v592
          %v677 = vpop.f32.mrb[0].mxu0
          %v678 = vadd.f32 %v481, %v677
          %v679 = vpop.f32.mrb[0].mxu0
          %v680 = vadd.f32 %v481, %v679
          %v681 = vpop.f32.mrb[0].mxu0
          %v682 = vadd.f32 %v486, %v681
          %v683 = vpop.f32.mrb[0].mxu0
          %v684 = vadd.f32 %v486, %v683
          %685 = vmatprep.mubr.bf16.mxu0 0
          %686 = vmatmul.mubr.bf16.gmra.mrb[0].mxu0 %v595
          %v687 = vpop.f32.mrb[0].mxu0
          %v688 = vadd.f32 %v491, %v687
          %v689 = vpop.f32.mrb[0].mxu0
          %v690 = vadd.f32 %v491, %v689
          %v691 = vpop.f32.mrb[0].mxu0
          %v692 = vadd.f32 %v496, %v691
          %v693 = vpop.f32.mrb[0].mxu0
          %v694 = vadd.f32 %v496, %v693
          %695 = vmatprep.mubr.bf16.mxu0 0
          %696 = vmatmul.mubr.bf16.gmra.mrb[0].mxu0 %v598
          %v697 = vpop.f32.mrb[0].mxu0
          %v698 = vadd.f32 %v501, %v697
          %v699 = vpop.f32.mrb[0].mxu0
          %v700 = vadd.f32 %v501, %v699
          %v701 = vpop.f32.mrb[0].mxu0
          %v702 = vadd.f32 %v506, %v701
          %v703 = vpop.f32.mrb[0].mxu0
          %v704 = vadd.f32 %v506, %v703
          %705 = vmatprep.mubr.bf16.mxu0 0
          %706 = vmatmul.mubr.bf16.gmra.mrb[0].mxu0 %v601
          %v707 = vpop.f32.mrb[0].mxu0
          %v708 = vadd.f32 %v511, %v707
          %v709 = vpop.f32.mrb[0].mxu0
          %v710 = vadd.f32 %v511, %v709
          %v711 = vpop.f32.mrb[0].mxu0
          %v712 = vadd.f32 %v516, %v711
          %v713 = vpop.f32.mrb[0].mxu0
          %v714 = vadd.f32 %v516, %v713
          %715 = vdwg.mxu0
          %v716 = vpack.c.bf16 %v642, %v638
          %v717 = vpack.c.bf16 %v644, %v640
          %v718 = vpack.c.bf16 %v652, %v648
          %v719 = vpack.c.bf16 %v654, %v650
          %v720 = vpack.c.bf16 %v662, %v658
          %v721 = vpack.c.bf16 %v664, %v660
          %v722 = vpack.c.bf16 %v672, %v668
          %v723 = vpack.c.bf16 %v674, %v670
          %v724 = vpack.c.bf16 %v682, %v678
          %v725 = vpack.c.bf16 %v684, %v680
          %v726 = vpack.c.bf16 %v692, %v688
          %v727 = vpack.c.bf16 %v694, %v690
          %v728 = vpack.c.bf16 %v702, %v698
          %v729 = vpack.c.bf16 %v704, %v700
          %v730 = vpack.c.bf16 %v712, %v708
          %v731 = vpack.c.bf16 %v714, %v710
          %732 = vxpose.xlu0.c.b16.start [1/8] %v716, 128
          %733 = vxpose.xlu0.c.b16.cont [2/8] %v718, 128
          %734 = vxpose.xlu0.c.b16.cont [3/8] %v720, 128
          %735 = vxpose.xlu0.c.b16.cont [4/8] %v722, 128
          %736 = vxpose.xlu0.c.b16.cont [5/8] %v724, 128
          %737 = vxpose.xlu0.c.b16.cont [6/8] %v726, 128
          %738 = vxpose.xlu0.c.b16.cont [7/8] %v728, 128
          %739 = vxpose.xlu0.c.b16.end [8/8] %v730, 128
          %v740 = vpop.trf.xlu0
          %v741 = vpop.trf.xlu0
          %v742 = vpop.trf.xlu0
          %v743 = vpop.trf.xlu0
          %v744 = vpop.trf.xlu0
          %v745 = vpop.trf.xlu0
          %v746 = vpop.trf.xlu0
          %v747 = vpop.trf.xlu0
          %748 = vxpose.xlu0.c.b16.start [1/8] %v717, 128
          %749 = vxpose.xlu0.c.b16.cont [2/8] %v719, 128
          %750 = vxpose.xlu0.c.b16.cont [3/8] %v721, 128
          %751 = vxpose.xlu0.c.b16.cont [4/8] %v723, 128
          %752 = vxpose.xlu0.c.b16.cont [5/8] %v725, 128
          %753 = vxpose.xlu0.c.b16.cont [6/8] %v727, 128
          %754 = vxpose.xlu0.c.b16.cont [7/8] %v729, 128
          %755 = vxpose.xlu0.c.b16.end [8/8] %v731, 128
          %v756 = vpop.trf.xlu0
          %v757 = vpop.trf.xlu0
          %v758 = vpop.trf.xlu0
          %v759 = vpop.trf.xlu0
          %v760 = vpop.trf.xlu0
          %v761 = vpop.trf.xlu0
          %v762 = vpop.trf.xlu0
          %v763 = vpop.trf.xlu0
          %764 = vst [vmem:[#allocation2] sm:$0xff] %v740
          %765 = vst [vmem:[#allocation2 + $0x8] sm:$0xff] %v741
          %766 = vst [vmem:[#allocation2 + $0x10] sm:$0xff] %v742
          %767 = vst [vmem:[#allocation2 + $0x18] sm:$0xff] %v743
          %768 = vst [vmem:[#allocation2 + $0x20] sm:$0xff] %v744
          %769 = vst [vmem:[#allocation2 + $0x28] sm:$0xff] %v745
          %770 = vst [vmem:[#allocation2 + $0x30] sm:$0xff] %v746
          %771 = vst [vmem:[#allocation2 + $0x38] sm:$0xff] %v747
          %772 = vst [vmem:[#allocation2 + $0x40] sm:$0xff] %v756
          %773 = vst [vmem:[#allocation2 + $0x48] sm:$0xff] %v757
          %774 = vst [vmem:[#allocation2 + $0x50] sm:$0xff] %v758
          %775 = vst [vmem:[#allocation2 + $0x58] sm:$0xff] %v759
          %776 = vst [vmem:[#allocation2 + $0x60] sm:$0xff] %v760
          %777 = vst [vmem:[#allocation2 + $0x68] sm:$0xff] %v761
          %778 = vst [vmem:[#allocation2 + $0x70] sm:$0xff] %v762
          %779 = vst [vmem:[#allocation2 + $0x78] sm:$0xff] %v763
          %v780 = vld [vmem:[#allocation13] sm:$0xf]
          %v781 = vld [vmem:[#allocation13 + $0x4] sm:$0xf]
          %v782 = vld [vmem:[#allocation13 + $0x8] sm:$0xf]
          %v783 = vld [vmem:[#allocation13 + $0xc] sm:$0xf]
          %v784 = vld [vmem:[#allocation14] sm:$0xff]
          %v785 = vld [vmem:[#allocation14 + $0x8] sm:$0xff]
          %v786 = vld [vmem:[#allocation14 + $0x10] sm:$0xff]
          %v787 = vld [vmem:[#allocation14 + $0x18] sm:$0xff]
          %789 = vset.pattern.permute.xlu0 0
          %790 = vperm.xlu0 %789, %v784
          %v791 = vpop.permute.xlu0 %790
          %794 = vset.pattern.permute.xlu0 0
          %795 = vperm.xlu0 %794, %v785
          %v796 = vpop.permute.xlu0 %795
          %799 = vset.pattern.permute.xlu0 0
          %800 = vperm.xlu0 %799, %v786
          %v801 = vpop.permute.xlu0 %800
          %804 = vset.pattern.permute.xlu0 0
          %805 = vperm.xlu0 %804, %v787
          %v806 = vpop.permute.xlu0 %805
          %v812 = vunpack.c.l.b16 %v780
          %v813 = vunpack.c.l.b16 %v781
          %v814 = vunpack.c.l.b16 %v782
          %v815 = vunpack.c.l.b16 %v783
          %v816 = vpack.c.b16 %v813, %v812
          %v817 = vpack.c.b16 %v815, %v814
          %v819 = vsel %vm578, %v816, 0
          %v822 = vsel %vm578, %v817, 0
          %824 = vmatprep.subr.bf16.mxu0 %v571
          %825 = vmatpush1.bf16.msra.mxu0 %v570
          %826 = vmatprep.subr.bf16.mxu0 %v573
          %827 = vmatpush1.bf16.msra.mxu0 %v572
          %828 = vmatprep.subr.bf16.mxu0 0
          %829 = vmatpush1.bf16.msra.mxu0 0
          %830 = vmatprep.subr.bf16.mxu0 0
          %831 = vmatpush1.bf16.msra.mxu0 0
          %832 = vmatprep.subr.bf16.mxu0 0
          %833 = vmatpush1.bf16.msra.mxu0 0
          %834 = vmatprep.subr.bf16.mxu0 0
          %835 = vmatpush1.bf16.msra.mxu0 0
          %836 = vmatprep.subr.bf16.mxu0 0
          %837 = vmatpush1.bf16.msra.mxu0 0
          %838 = vmatprep.subr.bf16.mxu0 0
          %839 = vmatpush1.bf16.msra.mxu0 0
          %840 = vmatprep.subr.bf16.mxu0 0
          %841 = vmatpush1.bf16.msra.mxu0 0
          %842 = vmatprep.subr.bf16.mxu0 0
          %843 = vmatpush1.bf16.msra.mxu0 0
          %844 = vmatprep.subr.bf16.mxu0 0
          %845 = vmatpush1.bf16.msra.mxu0 0
          %846 = vmatprep.subr.bf16.mxu0 0
          %847 = vmatpush1.bf16.msra.mxu0 0
          %848 = vmatprep.subr.bf16.mxu0 0
          %849 = vmatpush1.bf16.msra.mxu0 0
          %850 = vmatprep.subr.bf16.mxu0 0
          %851 = vmatpush1.bf16.msra.mxu0 0
          %852 = vmatprep.subr.bf16.mxu0 0
          %853 = vmatpush1.bf16.msra.mxu0 0
          %854 = vmatprep.subr.bf16.mxu0 0
          %855 = vmatpush1.bf16.msra.mxu0 0
          %856 = vmatprep.mubr.bf16.mxu0 0
          %857 = vmatmul.mubr.bf16.gmra.mrb[0].mxu0 %v819
          %v858 = vpop.f32.mrb[0].mxu0
          %v859 = vadd.f32 %v791, %v858
          %v860 = vpop.f32.mrb[0].mxu0
          %v861 = vadd.f32 %v791, %v860
          %v862 = vpop.f32.mrb[0].mxu0
          %v863 = vadd.f32 %v796, %v862
          %v864 = vpop.f32.mrb[0].mxu0
          %v865 = vadd.f32 %v796, %v864
          %866 = vmatprep.mubr.bf16.mxu0 0
          %867 = vmatmul.mubr.bf16.gmra.mrb[0].mxu0 %v822
          %v868 = vpop.f32.mrb[0].mxu0
          %v869 = vadd.f32 %v801, %v868
          %v870 = vpop.f32.mrb[0].mxu0
          %v871 = vadd.f32 %v801, %v870
          %v872 = vpop.f32.mrb[0].mxu0
          %v873 = vadd.f32 %v806, %v872
          %v874 = vpop.f32.mrb[0].mxu0
          %v875 = vadd.f32 %v806, %v874
          %876 = vdwg.mxu0
          %v877 = vpack.c.bf16 %v863, %v859
          %v878 = vpack.c.bf16 %v865, %v861
          %v879 = vpack.c.bf16 %v873, %v869
          %v880 = vpack.c.bf16 %v875, %v871
          %v885 = vunpack.c.l.b16 %v877
          %v886 = vunpack.c.l.b16 %v878
          %v887 = vunpack.c.h.b16 %v877
          %v888 = vunpack.c.h.b16 %v878
          %v889 = vunpack.c.l.b16 %v879
          %v890 = vunpack.c.l.b16 %v880
          %v891 = vunpack.c.h.b16 %v879
          %v892 = vunpack.c.h.b16 %v880
          %v893 = vpack.c.b16 %v886, %v885
          %v894 = vpack.c.b16 %v888, %v887
          %v895 = vpack.c.b16 %v890, %v889
          %v896 = vpack.c.b16 %v892, %v891
          %901 = vst [vmem:[#allocation3] sm:$0xff] %v893
          %902 = vst [vmem:[#allocation3 + $0x8] sm:$0xff] %v894
          %903 = vst [vmem:[#allocation3 + $0x10] sm:$0xff] %v895
          %904 = vst [vmem:[#allocation3 + $0x18] sm:$0xff] %v896
          %905 = vst [vmem:[#allocation3 + $0x20] sm:$0xff] 1065369472
        $region76: #{tpu_custom_call.1} parent=47 // pred_fallthru
          _
        %v906 = vld [vmem:[%s345] sm:$0xff]
        %v907 = vld [vmem:[%s345 + $0x8] sm:$0xff]
        %v908 = vld [vmem:[%s345 + $0x10] sm:$0xff]
        %v909 = vld [vmem:[%s345 + $0x18] sm:$0xff]
        %v910 = vld [vmem:[#allocation10] sm:$0xf]
        %v911 = vld [vmem:[#allocation10 + $0x4] sm:$0xf]
        %v912 = vld [vmem:[#allocation10 + $0x8] sm:$0xf]
        %v913 = vld [vmem:[#allocation10 + $0xc] sm:$0xf]
        %v914 = vld [vmem:[#allocation10 + $0x10] sm:$0xf]
        %v915 = vld [vmem:[#allocation10 + $0x14] sm:$0xf]
        %v916 = vld [vmem:[#allocation10 + $0x18] sm:$0xf]
        %v917 = vld [vmem:[#allocation10 + $0x1c] sm:$0xf]
        %v918 = vld [vmem:[#allocation10 + $0x20] sm:$0xf]
        %v919 = vld [vmem:[#allocation10 + $0x24] sm:$0xf]
        %v920 = vld [vmem:[#allocation10 + $0x28] sm:$0xf]
        %v921 = vld [vmem:[#allocation10 + $0x2c] sm:$0xf]
        %v922 = vld [vmem:[#allocation10 + $0x30] sm:$0xf]
        %v923 = vld [vmem:[#allocation10 + $0x34] sm:$0xf]
        %v924 = vld [vmem:[#allocation10 + $0x38] sm:$0xf]
        %v925 = vld [vmem:[#allocation10 + $0x3c] sm:$0xf]
        %v926 = vpack.c.bf16 %v907, %v906
        %v927 = vpack.c.bf16 %v909, %v908
        %v928 = vld [vmem:[#allocation11] sm:$0xff]
        %v929 = vld [vmem:[#allocation11 + $0x8] sm:$0xff]
        %v930 = vld [vmem:[#allocation11 + $0x10] sm:$0xff]
        %v931 = vld [vmem:[#allocation11 + $0x18] sm:$0xff]
        %v932 = vld [vmem:[#allocation11 + $0x20] sm:$0xff]
        %v933 = vld [vmem:[#allocation11 + $0x28] sm:$0xff]
        %v934 = vld [vmem:[#allocation11 + $0x30] sm:$0xff]
        %v935 = vld [vmem:[#allocation11 + $0x38] sm:$0xff]
        %v936 = vld [vmem:[#allocation11 + $0x40] sm:$0xff]
        %v937 = vld [vmem:[#allocation11 + $0x48] sm:$0xff]
        %v938 = vld [vmem:[#allocation11 + $0x50] sm:$0xff]
        %v939 = vld [vmem:[#allocation11 + $0x58] sm:$0xff]
        %v940 = vld [vmem:[#allocation11 + $0x60] sm:$0xff]
        %v941 = vld [vmem:[#allocation11 + $0x68] sm:$0xff]
        %v942 = vld [vmem:[#allocation11 + $0x70] sm:$0xff]
        %v943 = vld [vmem:[#allocation11 + $0x78] sm:$0xff]
        %945 = vset.pattern.permute.xlu0 0
        %946 = vperm.xlu0 %945, %v928
        %v947 = vpop.permute.xlu0 %946
        %950 = vset.pattern.permute.xlu0 0
        %951 = vperm.xlu0 %950, %v929
        %v952 = vpop.permute.xlu0 %951
        %955 = vset.pattern.permute.xlu0 0
        %956 = vperm.xlu0 %955, %v930
        %v957 = vpop.permute.xlu0 %956
        %960 = vset.pattern.permute.xlu0 0
        %961 = vperm.xlu0 %960, %v931
        %v962 = vpop.permute.xlu0 %961
        %965 = vset.pattern.permute.xlu0 0
        %966 = vperm.xlu0 %965, %v932
        %v967 = vpop.permute.xlu0 %966
        %970 = vset.pattern.permute.xlu0 0
        %971 = vperm.xlu0 %970, %v933
        %v972 = vpop.permute.xlu0 %971
        %975 = vset.pattern.permute.xlu0 0
        %976 = vperm.xlu0 %975, %v934
        %v977 = vpop.permute.xlu0 %976
        %980 = vset.pattern.permute.xlu0 0
        %981 = vperm.xlu0 %980, %v935
        %v982 = vpop.permute.xlu0 %981
        %985 = vset.pattern.permute.xlu0 0
        %986 = vperm.xlu0 %985, %v936
        %v987 = vpop.permute.xlu0 %986
        %990 = vset.pattern.permute.xlu0 0
        %991 = vperm.xlu0 %990, %v937
        %v992 = vpop.permute.xlu0 %991
        %995 = vset.pattern.permute.xlu0 0
        %996 = vperm.xlu0 %995, %v938
        %v997 = vpop.permute.xlu0 %996
        %1000 = vset.pattern.permute.xlu0 0
        %1001 = vperm.xlu0 %1000, %v939
        %v1002 = vpop.permute.xlu0 %1001
        %1005 = vset.pattern.permute.xlu0 0
        %1006 = vperm.xlu0 %1005, %v940
        %v1007 = vpop.permute.xlu0 %1006
        %1010 = vset.pattern.permute.xlu0 0
        %1011 = vperm.xlu0 %1010, %v941
        %v1012 = vpop.permute.xlu0 %1011
        %1015 = vset.pattern.permute.xlu0 0
        %1016 = vperm.xlu0 %1015, %v942
        %v1017 = vpop.permute.xlu0 %1016
        %1020 = vset.pattern.permute.xlu0 0
        %1021 = vperm.xlu0 %1020, %v943
        %v1022 = vpop.permute.xlu0 %1021
        %v1040 = vunpack.c.l.b16 %v910
        %v1041 = vunpack.c.l.b16 %v911
        %v1042 = vunpack.c.l.b16 %v912
        %v1043 = vunpack.c.l.b16 %v913
        %v1044 = vunpack.c.l.b16 %v914
        %v1045 = vunpack.c.l.b16 %v915
        %v1046 = vunpack.c.l.b16 %v916
        %v1047 = vunpack.c.l.b16 %v917
        %v1048 = vunpack.c.l.b16 %v918
        %v1049 = vunpack.c.l.b16 %v919
        %v1050 = vunpack.c.l.b16 %v920
        %v1051 = vunpack.c.l.b16 %v921
        %v1052 = vunpack.c.l.b16 %v922
        %v1053 = vunpack.c.l.b16 %v923
        %v1054 = vunpack.c.l.b16 %v924
        %v1055 = vunpack.c.l.b16 %v925
        %v1056 = vpack.c.b16 %v1041, %v1040
        %v1057 = vpack.c.b16 %v1043, %v1042
        %v1058 = vpack.c.b16 %v1045, %v1044
        %v1059 = vpack.c.b16 %v1047, %v1046
        %v1060 = vpack.c.b16 %v1049, %v1048
        %v1061 = vpack.c.b16 %v1051, %v1050
        %v1062 = vpack.c.b16 %v1053, %v1052
        %v1063 = vpack.c.b16 %v1055, %v1054
        %vm1064 = vcmask 261120
        %v1066 = vsel %vm1064, %v1056, 0
        %v1069 = vsel %vm1064, %v1057, 0
        %v1072 = vsel %vm1064, %v1058, 0
        %v1075 = vsel %vm1064, %v1059, 0
        %v1078 = vsel %vm1064, %v1060, 0
        %v1081 = vsel %vm1064, %v1061, 0
        %v1084 = vsel %vm1064, %v1062, 0
        %v1087 = vsel %vm1064, %v1063, 0
        %1089 = vmatprep.subr.bf16.mxu0 0
        %1090 = vmatpush1.bf16.msra.mxu0 %v926
        %1091 = vmatprep.subr.bf16.mxu0 0
        %1092 = vmatpush1.bf16.msra.mxu0 %v927
        %1093 = vmatprep.subr.bf16.mxu0 0
        %1094 = vmatpush1.bf16.msra.mxu0 0
        %1095 = vmatprep.subr.bf16.mxu0 0
        %1096 = vmatpush1.bf16.msra.mxu0 0
        %1097 = vmatprep.subr.bf16.mxu0 0
        %1098 = vmatpush1.bf16.msra.mxu0 0
        %1099 = vmatprep.subr.bf16.mxu0 0
        %1100 = vmatpush1.bf16.msra.mxu0 0
        %1101 = vmatprep.subr.bf16.mxu0 0
        %1102 = vmatpush1.bf16.msra.mxu0 0
        %1103 = vmatprep.subr.bf16.mxu0 0
        %1104 = vmatpush1.bf16.msra.mxu0 0
        %1105 = vmatprep.subr.bf16.mxu0 0
        %1106 = vmatpush1.bf16.msra.mxu0 0
        %1107 = vmatprep.subr.bf16.mxu0 0
        %1108 = vmatpush1.bf16.msra.mxu0 0
        %1109 = vmatprep.subr.bf16.mxu0 0
        %1110 = vmatpush1.bf16.msra.mxu0 0
        %1111 = vmatprep.subr.bf16.mxu0 0
        %1112 = vmatpush1.bf16.msra.mxu0 0
        %1113 = vmatprep.subr.bf16.mxu0 0
        %1114 = vmatpush1.bf16.msra.mxu0 0
        %1115 = vmatprep.subr.bf16.mxu0 0
        %1116 = vmatpush1.bf16.msra.mxu0 0
        %1117 = vmatprep.subr.bf16.mxu0 0
        %1118 = vmatpush1.bf16.msra.mxu0 0
        %1119 = vmatprep.subr.bf16.mxu0 0
        %1120 = vmatpush1.bf16.msra.mxu0 0
        %1121 = vmatprep.mubr.bf16.mxu0 0
        %1122 = vmatmul.mubr.bf16.gmra.mrb[0].mxu0 %v1066
        %v1123 = vpop.f32.mrb[0].mxu0
        %v1124 = vadd.f32 %v947, %v1123
        %v1125 = vpop.f32.mrb[0].mxu0
        %v1126 = vpop.f32.mrb[0].mxu0
        %v1127 = vadd.f32 %v952, %v1126
        %v1128 = vpop.f32.mrb[0].mxu0
        %1129 = vmatprep.mubr.bf16.mxu0 0
        %1130 = vmatmul.mubr.bf16.gmra.mrb[0].mxu0 %v1069
        %v1131 = vpop.f32.mrb[0].mxu0
        %v1132 = vadd.f32 %v957, %v1131
        %v1133 = vpop.f32.mrb[0].mxu0
        %v1134 = vpop.f32.mrb[0].mxu0
        %v1135 = vadd.f32 %v962, %v1134
        %v1136 = vpop.f32.mrb[0].mxu0
        %1137 = vmatprep.mubr.bf16.mxu0 0
        %1138 = vmatmul.mubr.bf16.gmra.mrb[0].mxu0 %v1072
        %v1139 = vpop.f32.mrb[0].mxu0
        %v1140 = vadd.f32 %v967, %v1139
        %v1141 = vpop.f32.mrb[0].mxu0
        %v1142 = vpop.f32.mrb[0].mxu0
        %v1143 = vadd.f32 %v972, %v1142
        %v1144 = vpop.f32.mrb[0].mxu0
        %1145 = vmatprep.mubr.bf16.mxu0 0
        %1146 = vmatmul.mubr.bf16.gmra.mrb[0].mxu0 %v1075
        %v1147 = vpop.f32.mrb[0].mxu0
        %v1148 = vadd.f32 %v977, %v1147
        %v1149 = vpop.f32.mrb[0].mxu0
        %v1150 = vpop.f32.mrb[0].mxu0
        %v1151 = vadd.f32 %v982, %v1150
        %v1152 = vpop.f32.mrb[0].mxu0
        %1153 = vmatprep.mubr.bf16.mxu0 0
        %1154 = vmatmul.mubr.bf16.gmra.mrb[0].mxu0 %v1078
        %v1155 = vpop.f32.mrb[0].mxu0
        %v1156 = vadd.f32 %v987, %v1155
        %v1157 = vpop.f32.mrb[0].mxu0
        %v1158 = vpop.f32.mrb[0].mxu0
        %v1159 = vadd.f32 %v992, %v1158
        %v1160 = vpop.f32.mrb[0].mxu0
        %1161 = vmatprep.mubr.bf16.mxu0 0
        %1162 = vmatmul.mubr.bf16.gmra.mrb[0].mxu0 %v1081
        %v1163 = vpop.f32.mrb[0].mxu0
        %v1164 = vadd.f32 %v997, %v1163
        %v1165 = vpop.f32.mrb[0].mxu0
        %v1166 = vpop.f32.mrb[0].mxu0
        %v1167 = vadd.f32 %v1002, %v1166
        %v1168 = vpop.f32.mrb[0].mxu0
        %1169 = vmatprep.mubr.bf16.mxu0 0
        %1170 = vmatmul.mubr.bf16.gmra.mrb[0].mxu0 %v1084
        %v1171 = vpop.f32.mrb[0].mxu0
        %v1172 = vadd.f32 %v1007, %v1171
        %v1173 = vpop.f32.mrb[0].mxu0
        %v1174 = vpop.f32.mrb[0].mxu0
        %v1175 = vadd.f32 %v1012, %v1174
        %v1176 = vpop.f32.mrb[0].mxu0
        %1177 = vmatprep.mubr.bf16.mxu0 0
        %1178 = vmatmul.mubr.bf16.gmra.mrb[0].mxu0 %v1087
        %v1179 = vpop.f32.mrb[0].mxu0
        %v1180 = vadd.f32 %v1017, %v1179
        %v1181 = vpop.f32.mrb[0].mxu0
        %v1182 = vpop.f32.mrb[0].mxu0
        %v1183 = vadd.f32 %v1022, %v1182
        %v1184 = vpop.f32.mrb[0].mxu0
        %1185 = vdwg.mxu0
        %v1186 = vld [vmem:[#allocation2] sm:$0xff]
        %v1187 = vld [vmem:[#allocation2 + $0x8] sm:$0xff]
        %v1188 = vld [vmem:[#allocation2 + $0x10] sm:$0xff]
        %v1189 = vld [vmem:[#allocation2 + $0x18] sm:$0xff]
        %v1190 = vld [vmem:[#allocation2 + $0x20] sm:$0xff]
        %v1191 = vld [vmem:[#allocation2 + $0x28] sm:$0xff]
        %v1192 = vld [vmem:[#allocation2 + $0x30] sm:$0xff]
        %v1193 = vld [vmem:[#allocation2 + $0x38] sm:$0xff]
        %v1194 = vld [vmem:[#allocation2 + $0x40] sm:$0xff]
        %v1195 = vld [vmem:[#allocation2 + $0x48] sm:$0xff]
        %v1196 = vld [vmem:[#allocation2 + $0x50] sm:$0xff]
        %v1197 = vld [vmem:[#allocation2 + $0x58] sm:$0xff]
        %v1198 = vld [vmem:[#allocation2 + $0x60] sm:$0xff]
        %v1199 = vld [vmem:[#allocation2 + $0x68] sm:$0xff]
        %v1200 = vld [vmem:[#allocation2 + $0x70] sm:$0xff]
        %v1201 = vld [vmem:[#allocation2 + $0x78] sm:$0xff]
        %v1202 = vpack.c.bf16 %v1127, %v1124
        %v1203 = vpack.c.bf16 %v1135, %v1132
        %v1204 = vpack.c.bf16 %v1143, %v1140
        %v1205 = vpack.c.bf16 %v1151, %v1148
        %v1206 = vpack.c.bf16 %v1159, %v1156
        %v1207 = vpack.c.bf16 %v1167, %v1164
        %v1208 = vpack.c.bf16 %v1175, %v1172
        %v1209 = vpack.c.bf16 %v1183, %v1180
        %1210 = vmatprep.subr.bf16.mxu0 0
        %1211 = vmatpush1.bf16.msra.mxu0 %v1202
        %1212 = vmatprep.subr.bf16.mxu0 0
        %1213 = vmatpush1.bf16.msra.mxu0 %v1203
        %1214 = vmatprep.subr.bf16.mxu0 0
        %1215 = vmatpush1.bf16.msra.mxu0 %v1204
        %1216 = vmatprep.subr.bf16.mxu0 0
        %1217 = vmatpush1.bf16.msra.mxu0 %v1205
        %1218 = vmatprep.subr.bf16.mxu0 0
        %1219 = vmatpush1.bf16.msra.mxu0 %v1206
        %1220 = vmatprep.subr.bf16.mxu0 0
        %1221 = vmatpush1.bf16.msra.mxu0 %v1207
        %1222 = vmatprep.subr.bf16.mxu0 0
        %1223 = vmatpush1.bf16.msra.mxu0 %v1208
        %1224 = vmatprep.subr.bf16.mxu0 0
        %1225 = vmatpush1.bf16.msra.mxu0 %v1209
        %1226 = vmatprep.subr.bf16.mxu0 0
        %1227 = vmatpush1.bf16.msra.mxu0 0
        %1228 = vmatprep.subr.bf16.mxu0 0
        %1229 = vmatpush1.bf16.msra.mxu0 0
        %1230 = vmatprep.subr.bf16.mxu0 0
        %1231 = vmatpush1.bf16.msra.mxu0 0
        %1232 = vmatprep.subr.bf16.mxu0 0
        %1233 = vmatpush1.bf16.msra.mxu0 0
        %1234 = vmatprep.subr.bf16.mxu0 0
        %1235 = vmatpush1.bf16.msra.mxu0 0
        %1236 = vmatprep.subr.bf16.mxu0 0
        %1237 = vmatpush1.bf16.msra.mxu0 0
        %1238 = vmatprep.subr.bf16.mxu0 0
        %1239 = vmatpush1.bf16.msra.mxu0 0
        %1240 = vmatprep.subr.bf16.mxu0 0
        %1241 = vmatpush1.bf16.msra.mxu0 0
        %1242 = vmatprep.mubr.bf16.mxu0 0
        %1243 = vmatmul.mubr.bf16.gmra.mrb[0].mxu0 %v1186
        %v1244 = vpop.f32.mrb[0].mxu0
        %v1245 = vadd.f32 0.0, %v1244
        %v1246 = vpop.f32.mrb[0].mxu0
        %v1247 = vpop.f32.mrb[0].mxu0
        %v1248 = vadd.f32 0.0, %v1247
        %v1249 = vpop.f32.mrb[0].mxu0
        %1250 = vmatprep.mubr.bf16.mxu0 0
        %1251 = vmatmul.mubr.bf16.gmra.mrb[0].mxu0 %v1187
        %v1252 = vpop.f32.mrb[0].mxu0
        %v1253 = vadd.f32 0.0, %v1252
        %v1254 = vpop.f32.mrb[0].mxu0
        %v1255 = vpop.f32.mrb[0].mxu0
        %v1256 = vadd.f32 0.0, %v1255
        %v1257 = vpop.f32.mrb[0].mxu0
        %1258 = vmatprep.mubr.bf16.mxu0 0
        %1259 = vmatmul.mubr.bf16.gmra.mrb[0].mxu0 %v1188
        %v1260 = vpop.f32.mrb[0].mxu0
        %v1261 = vadd.f32 0.0, %v1260
        %v1262 = vpop.f32.mrb[0].mxu0
        %v1263 = vpop.f32.mrb[0].mxu0
        %v1264 = vadd.f32 0.0, %v1263
        %v1265 = vpop.f32.mrb[0].mxu0
        %1266 = vmatprep.mubr.bf16.mxu0 0
        %1267 = vmatmul.mubr.bf16.gmra.mrb[0].mxu0 %v1189
        %v1268 = vpop.f32.mrb[0].mxu0
        %v1269 = vadd.f32 0.0, %v1268
        %v1270 = vpop.f32.mrb[0].mxu0
        %v1271 = vpop.f32.mrb[0].mxu0
        %v1272 = vadd.f32 0.0, %v1271
        %v1273 = vpop.f32.mrb[0].mxu0
        %1274 = vmatprep.mubr.bf16.mxu0 0
        %1275 = vmatmul.mubr.bf16.gmra.mrb[0].mxu0 %v1190
        %v1276 = vpop.f32.mrb[0].mxu0
        %v1277 = vadd.f32 0.0, %v1276
        %v1278 = vpop.f32.mrb[0].mxu0
        %v1279 = vpop.f32.mrb[0].mxu0
        %v1280 = vadd.f32 0.0, %v1279
        %v1281 = vpop.f32.mrb[0].mxu0
        %1282 = vmatprep.mubr.bf16.mxu0 0
        %1283 = vmatmul.mubr.bf16.gmra.mrb[0].mxu0 %v1191
        %v1284 = vpop.f32.mrb[0].mxu0
        %v1285 = vadd.f32 0.0, %v1284
        %v1286 = vpop.f32.mrb[0].mxu0
        %v1287 = vpop.f32.mrb[0].mxu0
        %v1288 = vadd.f32 0.0, %v1287
        %v1289 = vpop.f32.mrb[0].mxu0
        %1290 = vmatprep.mubr.bf16.mxu0 0
        %1291 = vmatmul.mubr.bf16.gmra.mrb[0].mxu0 %v1192
        %v1292 = vpop.f32.mrb[0].mxu0
        %v1293 = vadd.f32 0.0, %v1292
        %v1294 = vpop.f32.mrb[0].mxu0
        %v1295 = vpop.f32.mrb[0].mxu0
        %v1296 = vadd.f32 0.0, %v1295
        %v1297 = vpop.f32.mrb[0].mxu0
        %1298 = vmatprep.mubr.bf16.mxu0 0
        %1299 = vmatmul.mubr.bf16.gmra.mrb[0].mxu0 %v1193
        %v1300 = vpop.f32.mrb[0].mxu0
        %v1301 = vadd.f32 0.0, %v1300
        %v1302 = vpop.f32.mrb[0].mxu0
        %v1303 = vpop.f32.mrb[0].mxu0
        %v1304 = vadd.f32 0.0, %v1303
        %v1305 = vpop.f32.mrb[0].mxu0
        %1306 = vmatprep.mubr.bf16.mxu0 0
        %1307 = vmatmul.mubr.bf16.gmra.mrb[0].mxu0 %v1194
        %v1308 = vpop.f32.mrb[0].mxu0
        %v1309 = vadd.f32 0.0, %v1308
        %v1310 = vpop.f32.mrb[0].mxu0
        %v1311 = vpop.f32.mrb[0].mxu0
        %v1312 = vadd.f32 0.0, %v1311
        %v1313 = vpop.f32.mrb[0].mxu0
        %1314 = vmatprep.mubr.bf16.mxu0 0
        %1315 = vmatmul.mubr.bf16.gmra.mrb[0].mxu0 %v1195
        %v1316 = vpop.f32.mrb[0].mxu0
        %v1317 = vadd.f32 0.0, %v1316
        %v1318 = vpop.f32.mrb[0].mxu0
        %v1319 = vpop.f32.mrb[0].mxu0
        %v1320 = vadd.f32 0.0, %v1319
        %v1321 = vpop.f32.mrb[0].mxu0
        %1322 = vmatprep.mubr.bf16.mxu0 0
        %1323 = vmatmul.mubr.bf16.gmra.mrb[0].mxu0 %v1196
        %v1324 = vpop.f32.mrb[0].mxu0
        %v1325 = vadd.f32 0.0, %v1324
        %v1326 = vpop.f32.mrb[0].mxu0
        %v1327 = vpop.f32.mrb[0].mxu0
        %v1328 = vadd.f32 0.0, %v1327
        %v1329 = vpop.f32.mrb[0].mxu0
        %1330 = vmatprep.mubr.bf16.mxu0 0
        %1331 = vmatmul.mubr.bf16.gmra.mrb[0].mxu0 %v1197
        %v1332 = vpop.f32.mrb[0].mxu0
        %v1333 = vadd.f32 0.0, %v1332
        %v1334 = vpop.f32.mrb[0].mxu0
        %v1335 = vpop.f32.mrb[0].mxu0
        %v1336 = vadd.f32 0.0, %v1335
        %v1337 = vpop.f32.mrb[0].mxu0
        %1338 = vmatprep.mubr.bf16.mxu0 0
        %1339 = vmatmul.mubr.bf16.gmra.mrb[0].mxu0 %v1198
        %v1340 = vpop.f32.mrb[0].mxu0
        %v1341 = vadd.f32 0.0, %v1340
        %v1342 = vpop.f32.mrb[0].mxu0
        %v1343 = vpop.f32.mrb[0].mxu0
        %v1344 = vadd.f32 0.0, %v1343
        %v1345 = vpop.f32.mrb[0].mxu0
        %1346 = vmatprep.mubr.bf16.mxu0 0
        %1347 = vmatmul.mubr.bf16.gmra.mrb[0].mxu0 %v1199
        %v1348 = vpop.f32.mrb[0].mxu0
        %v1349 = vadd.f32 0.0, %v1348
        %v1350 = vpop.f32.mrb[0].mxu0
        %v1351 = vpop.f32.mrb[0].mxu0
        %v1352 = vadd.f32 0.0, %v1351
        %v1353 = vpop.f32.mrb[0].mxu0
        %1354 = vmatprep.mubr.bf16.mxu0 0
        %1355 = vmatmul.mubr.bf16.gmra.mrb[0].mxu0 %v1200
        %v1356 = vpop.f32.mrb[0].mxu0
        %v1357 = vadd.f32 0.0, %v1356
        %v1358 = vpop.f32.mrb[0].mxu0
        %v1359 = vpop.f32.mrb[0].mxu0
        %v1360 = vadd.f32 0.0, %v1359
        %v1361 = vpop.f32.mrb[0].mxu0
        %1362 = vmatprep.mubr.bf16.mxu0 0
        %1363 = vmatmul.mubr.bf16.gmra.mrb[0].mxu0 %v1201
        %v1364 = vpop.f32.mrb[0].mxu0
        %v1365 = vadd.f32 0.0, %v1364
        %v1366 = vpop.f32.mrb[0].mxu0
        %v1367 = vpop.f32.mrb[0].mxu0
        %v1368 = vadd.f32 0.0, %v1367
        %v1369 = vpop.f32.mrb[0].mxu0
        %1370 = vdwg.mxu0
        %v1371 = vmax.f32 %v1245, %v1261
        %v1372 = vmax.f32 %v1248, %v1264
        %v1373 = vmax.f32 %v1253, %v1269
        %v1374 = vmax.f32 %v1256, %v1272
        %v1375 = vmax.f32 %v1371, %v1277
        %v1376 = vmax.f32 %v1372, %v1280
        %v1377 = vmax.f32 %v1373, %v1285
        %v1378 = vmax.f32 %v1374, %v1288
        %v1379 = vmax.f32 %v1375, %v1293
        %v1380 = vmax.f32 %v1376, %v1296
        %v1381 = vmax.f32 %v1377, %v1301
        %v1382 = vmax.f32 %v1378, %v1304
        %v1383 = vmax.f32 %v1379, %v1309
        %v1384 = vmax.f32 %v1380, %v1312
        %v1385 = vmax.f32 %v1381, %v1317
        %v1386 = vmax.f32 %v1382, %v1320
        %v1387 = vmax.f32 %v1383, %v1325
        %v1388 = vmax.f32 %v1384, %v1328
        %v1389 = vmax.f32 %v1385, %v1333
        %v1390 = vmax.f32 %v1386, %v1336
        %v1391 = vmax.f32 %v1387, %v1341
        %v1392 = vmax.f32 %v1388, %v1344
        %v1393 = vmax.f32 %v1389, %v1349
        %v1394 = vmax.f32 %v1390, %v1352
        %v1395 = vmax.f32 %v1391, %v1357
        %v1396 = vmax.f32 %v1392, %v1360
        %v1397 = vmax.f32 %v1393, %v1365
        %v1398 = vmax.f32 %v1394, %v1368
        %v1399 = vmax.f32 %v1395, %v1396
        %v1400 = vmax.f32 %v1397, %v1398
        %v1401 = vmax.f32 %v1399, %v1400
        %v1402 = vrot.slane %v1401, 4
        %v1403 = vmax.f32 %v1401, %v1402
        %v1404 = vrot.slane %v1403, 2
        %v1405 = vmax.f32 %v1403, %v1404
        %v1406 = vrot.slane %v1405, 1
        %v1407 = vmax.f32 %v1405, %v1406
        %v1408 = vsub.f32 %v1245, %v1407
        %v1409 = vsub.f32 %v1248, %v1407
        %v1410 = vsub.f32 %v1253, %v1407
        %v1411 = vsub.f32 %v1256, %v1407
        %v1412 = vsub.f32 %v1261, %v1407
        %v1413 = vsub.f32 %v1264, %v1407
        %v1414 = vsub.f32 %v1269, %v1407
        %v1415 = vsub.f32 %v1272, %v1407
        %v1416 = vsub.f32 %v1277, %v1407
        %v1417 = vsub.f32 %v1280, %v1407
        %v1418 = vsub.f32 %v1285, %v1407
        %v1419 = vsub.f32 %v1288, %v1407
        %v1420 = vsub.f32 %v1293, %v1407
        %v1421 = vsub.f32 %v1296, %v1407
        %v1422 = vsub.f32 %v1301, %v1407
        %v1423 = vsub.f32 %v1304, %v1407
        %v1424 = vsub.f32 %v1309, %v1407
        %v1425 = vsub.f32 %v1312, %v1407
        %v1426 = vsub.f32 %v1317, %v1407
        %v1427 = vsub.f32 %v1320, %v1407
        %v1428 = vsub.f32 %v1325, %v1407
        %v1429 = vsub.f32 %v1328, %v1407
        %v1430 = vsub.f32 %v1333, %v1407
        %v1431 = vsub.f32 %v1336, %v1407
        %v1432 = vsub.f32 %v1341, %v1407
        %v1433 = vsub.f32 %v1344, %v1407
        %v1434 = vsub.f32 %v1349, %v1407
        %v1435 = vsub.f32 %v1352, %v1407
        %v1436 = vsub.f32 %v1357, %v1407
        %v1437 = vsub.f32 %v1360, %v1407
        %v1438 = vsub.f32 %v1365, %v1407
        %v1439 = vsub.f32 %v1368, %v1407
        %v1440 = vpack.c.bf16 %v1409, %v1408
        %v1441 = vpack.c.bf16 %v1411, %v1410
        %v1442 = vpack.c.bf16 %v1413, %v1412
        %v1443 = vpack.c.bf16 %v1415, %v1414
        %v1444 = vpack.c.bf16 %v1417, %v1416
        %v1445 = vpack.c.bf16 %v1419, %v1418
        %v1446 = vpack.c.bf16 %v1421, %v1420
        %v1447 = vpack.c.bf16 %v1423, %v1422
        %v1448 = vpack.c.bf16 %v1425, %v1424
        %v1449 = vpack.c.bf16 %v1427, %v1426
        %v1450 = vpack.c.bf16 %v1429, %v1428
        %v1451 = vpack.c.bf16 %v1431, %v1430
        %v1452 = vpack.c.bf16 %v1433, %v1432
        %v1453 = vpack.c.bf16 %v1435, %v1434
        %v1454 = vpack.c.bf16 %v1437, %v1436
        %v1455 = vpack.c.bf16 %v1439, %v1438
        %v1457 = vmul.bf16 %v1440, 1069105081
        %v1458 = vpow.bf16.pop %v1457
        %v1460 = vmul.bf16 %v1441, 1069105081
        %v1461 = vpow.bf16.pop %v1460
        %v1463 = vmul.bf16 %v1442, 1069105081
        %v1464 = vpow.bf16.pop %v1463
        %v1466 = vmul.bf16 %v1443, 1069105081
        %v1467 = vpow.bf16.pop %v1466
        %v1469 = vmul.bf16 %v1444, 1069105081
        %v1470 = vpow.bf16.pop %v1469
        %v1472 = vmul.bf16 %v1445, 1069105081
        %v1473 = vpow.bf16.pop %v1472
        %v1475 = vmul.bf16 %v1446, 1069105081
        %v1476 = vpow.bf16.pop %v1475
        %v1478 = vmul.bf16 %v1447, 1069105081
        %v1479 = vpow.bf16.pop %v1478
        %v1481 = vmul.bf16 %v1448, 1069105081
        %v1482 = vpow.bf16.pop %v1481
        %v1484 = vmul.bf16 %v1449, 1069105081
        %v1485 = vpow.bf16.pop %v1484
        %v1487 = vmul.bf16 %v1450, 1069105081
        %v1488 = vpow.bf16.pop %v1487
        %v1490 = vmul.bf16 %v1451, 1069105081
        %v1491 = vpow.bf16.pop %v1490
        %v1493 = vmul.bf16 %v1452, 1069105081
        %v1494 = vpow.bf16.pop %v1493
        %v1496 = vmul.bf16 %v1453, 1069105081
        %v1497 = vpow.bf16.pop %v1496
        %v1499 = vmul.bf16 %v1454, 1069105081
        %v1500 = vpow.bf16.pop %v1499
        %v1502 = vmul.bf16 %v1455, 1069105081
        %v1503 = vpow.bf16.pop %v1502
        %v1504 = vld [vmem:[#allocation3] sm:$0xff]
        %v1505 = vld [vmem:[#allocation3 + $0x8] sm:$0xff]
        %v1506 = vld [vmem:[#allocation3 + $0x10] sm:$0xff]
        %v1507 = vld [vmem:[#allocation3 + $0x18] sm:$0xff]
        %v1508 = vld [vmem:[#allocation3 + $0x20] sm:$0xff]
        %v1514 = vunpack.c.l.b16 %v1504
        %v1515 = vunpack.c.h.b16 %v1504
        %v1516 = vunpack.c.l.b16 %v1505
        %v1517 = vunpack.c.h.b16 %v1505
        %v1518 = vunpack.c.l.b16 %v1506
        %v1519 = vunpack.c.h.b16 %v1506
        %v1520 = vunpack.c.l.b16 %v1507
        %v1521 = vunpack.c.h.b16 %v1507
        %v1522 = vunpack.c.l.b16 %v1508
        %v1523 = vunpack.c.h.b16 %v1508
        %v1524 = vpack.c.b16 %v1516, %v1514
        %v1525 = vpack.c.b16 %v1517, %v1515
        %v1526 = vpack.c.b16 %v1520, %v1518
        %v1527 = vpack.c.b16 %v1521, %v1519
        %v1528 = vpack.c.b16 %v1522, %v1522
        %v1529 = vpack.c.b16 %v1523, %v1523
        %1536 = vmatprep.subr.bf16.mxu0 0
        %1537 = vmatpush1.bf16.msra.mxu0 %v1458
        %1538 = vmatprep.subr.bf16.mxu0 0
        %1539 = vmatpush1.bf16.msra.mxu0 %v1461
        %1540 = vmatprep.subr.bf16.mxu0 0
        %1541 = vmatpush1.bf16.msra.mxu0 %v1464
        %1542 = vmatprep.subr.bf16.mxu0 0
        %1543 = vmatpush1.bf16.msra.mxu0 %v1467
        %1544 = vmatprep.subr.bf16.mxu0 0
        %1545 = vmatpush1.bf16.msra.mxu0 %v1470
        %1546 = vmatprep.subr.bf16.mxu0 0
        %1547 = vmatpush1.bf16.msra.mxu0 %v1473
        %1548 = vmatprep.subr.bf16.mxu0 0
        %1549 = vmatpush1.bf16.msra.mxu0 %v1476
        %1550 = vmatprep.subr.bf16.mxu0 0
        %1551 = vmatpush1.bf16.msra.mxu0 %v1479
        %1552 = vmatprep.subr.bf16.mxu0 0
        %1553 = vmatpush1.bf16.msra.mxu0 %v1482
        %1554 = vmatprep.subr.bf16.mxu0 0
        %1555 = vmatpush1.bf16.msra.mxu0 %v1485
        %1556 = vmatprep.subr.bf16.mxu0 0
        %1557 = vmatpush1.bf16.msra.mxu0 %v1488
        %1558 = vmatprep.subr.bf16.mxu0 0
        %1559 = vmatpush1.bf16.msra.mxu0 %v1491
        %1560 = vmatprep.subr.bf16.mxu0 0
        %1561 = vmatpush1.bf16.msra.mxu0 %v1494
        %1562 = vmatprep.subr.bf16.mxu0 0
        %1563 = vmatpush1.bf16.msra.mxu0 %v1497
        %1564 = vmatprep.subr.bf16.mxu0 0
        %1565 = vmatpush1.bf16.msra.mxu0 %v1500
        %1566 = vmatprep.subr.bf16.mxu0 0
        %1567 = vmatpush1.bf16.msra.mxu0 %v1503
        %1568 = vmatprep.mubr.bf16.mxu0 %v1525
        %1569 = vmatmul.mubr.bf16.gmra.mrb[0].mxu0 %v1524
        %v1570 = vpop.f32.mrb[0].mxu0
        %v1571 = vadd.f32 0.0, %v1570
        %v1572 = vpop.f32.mrb[0].mxu0
        %v1573 = vpop.f32.mrb[0].mxu0
        %v1574 = vadd.f32 0.0, %v1573
        %v1575 = vpop.f32.mrb[0].mxu0
        %1576 = vmatprep.mubr.bf16.mxu0 %v1527
        %1577 = vmatmul.mubr.bf16.gmra.mrb[0].mxu0 %v1526
        %v1578 = vpop.f32.mrb[0].mxu0
        %v1579 = vadd.f32 0.0, %v1578
        %v1580 = vpop.f32.mrb[0].mxu0
        %v1581 = vpop.f32.mrb[0].mxu0
        %v1582 = vadd.f32 0.0, %v1581
        %v1583 = vpop.f32.mrb[0].mxu0
        %1584 = vmatprep.mubr.bf16.mxu0 %v1529
        %1585 = vmatmul.mubr.bf16.gmra.mrb[0].mxu0 %v1528
        %v1586 = vpop.f32.mrb[0].mxu0
        %v1587 = vadd.f32 0.0, %v1586
        %v1588 = vpop.f32.mrb[0].mxu0
        %v1589 = vpop.f32.mrb[0].mxu0
        %v1590 = vpop.f32.mrb[0].mxu0
        %1591 = vdwg.mxu0
        %s1592 = sld [smem:[#allocation4]]
        %v1593 = vrcp.pop %v1587
        %v1594 = vstv %s1592
        %v1595 = vmul.f32 %v1594, %v1593
        %v1596 = vlaneseq
        %v1597 = vshrl.u32 %v1596, 7
        %v1598 = vsub.s32 0, %v1597
        %v1599 = vrot.slane %v1595, %v1598
        %v1600 = vmul.f32 %v1571, %v1599
        %v1601 = vmul.f32 %v1574, %v1599
        %v1602 = vmul.f32 %v1579, %v1599
        %v1603 = vmul.f32 %v1582, %v1599
        %v1604 = vadd.f32 %v1600, %v906
        %v1605 = vadd.f32 %v1601, %v907
        %v1606 = vadd.f32 %v1602, %v908
        %v1607 = vadd.f32 %v1603, %v909
        %1608 = vst [vmem:[%s395] sm:$0xff] %v1604
        %1609 = vst [vmem:[%s395 + $0x8] sm:$0xff] %v1605
        %1610 = vst [vmem:[%s395 + $0x10] sm:$0xff] %v1606
        %1611 = vst [vmem:[%s395 + $0x18] sm:$0xff] %v1607
        %s1612 = sand.u32 %s209, 1
        %s1613 = scalar_lea.sflag [#allocation7], %s1612
        %s1614 = sand.u32 %s209, 1
        %s1615 = smul.addr %s1614, 32
        %s1616 = scalar_lea.vmem [#allocation16], %s1615
        // Predicated region
        $region77: #{tpu_custom_call.1} parent=47 // pred_check
          %p1617 = pneg %p219
        $region78: #{tpu_custom_call.1} parent=47 // pred_check_branch
          %1619 = sbr.rel (%p1617) target = $region80
        $region79: #{tpu_custom_call.1} parent=47 // pred_region
          %s1621 = ssub.s32 512, 512
          %1622 = vsyncadd %s1613, %s1621
          %s1623 = smul.addr %s32, 8
          %s1624 = sadd.s32 %s33, %s1623
          %s1625 = smul.addr %s1624, 128
          %s1626 = scalar_lea.hbm %s7, %s1625
          %s1627 = sshll.u32 %s1616, 4
          %s1628 = int_to_ptr.vmem [resolvable:$true] %s1627
          %1633 = dma.vmem_to_hbm [thread:$0]  %s1628, 512, %s1626, %s1613, 128, 256, 8
        $region80: #{tpu_custom_call.1} parent=47 // pred_fallthru
          _
      $region48: #{tpu_custom_call.1} parent=5 // pred_fallthru
        _
      %p1634 = scmp.le.s32.totalorder 2, %s23
      // Predicated region
      $region81: #{tpu_custom_call.1} parent=5 // pred_check
        %p1635 = pneg %p1634
      $region82: #{tpu_custom_call.1} parent=5 // pred_check_branch
        %1637 = sbr.rel (%p1635) target = $region84
      $region83: #{tpu_custom_call.1} parent=5 // pred_region
        %s1638 = ssub.s32 %s23, 2
        // Predicated region
        $region85: #{tpu_custom_call.1} parent=83 // pred_check
          %p1639 = pneg %p225
        $region86: #{tpu_custom_call.1} parent=83 // pred_check_branch
          %1641 = sbr.rel (%p1639) target = $region88
        $region87: #{tpu_custom_call.1} parent=83 // pred_region
          %s1642 = sand.u32 %s210, 1
          %s1643 = scalar_lea.sflag [#allocation7], %s1642
          %s1644 = sand.u32 %s210, 1
          %s1645 = smul.addr %s1644, 32
          %s1646 = scalar_lea.vmem [#allocation16], %s1645
          %1647 = dma.done %s1643, 512
        $region88: #{tpu_custom_call.1} parent=83 // pred_fallthru
          _
      $region84: #{tpu_custom_call.1} parent=5 // pred_fallthru
        _
    $region6: #{tpu_custom_call.1} parent=1 // loop_footer
      %s27 = sadd.s32 1, %s23
    $region7: #{tpu_custom_call.1} parent=1 // loop_footer_branch
      %22 = sbr.rel target = $region3
    $region8: #{tpu_custom_call.1} parent=1 // loop_exit
      _
    %1648 = vsyncpa [#allocation6], 1
    %s1649 = scalar_lea.sflag [#allocation6], 1
    %1650 = vsyncpa %s1649, 1
    %1651 = vsyncpa [#allocation9], 1
    %1652 = vsyncpa [#allocation12], 1
    %1653 = vsyncpa [#allocation15], 1
    %1654 = vsyncpa [#allocation7], 1
    %s1655 = scalar_lea.sflag [#allocation7], 1
    %1656 = vsyncpa %s1655, 1

</llo_original>
